<compile_context>
chip_gen: v5e
topology: v5e:2x2
jax: 0.10.0
libtpu: 0.0.40
codegen_flags: <defaults>
</compile_context>

<pallas_src>
import functools

import jax
import jax.numpy as jnp
from jax.experimental import pallas as pl
from jax.experimental.pallas import tpu as pltpu
import numpy as np


def _round_up(x, m):
    return (x + m - 1) // m * m


def _vae_kernel(x_ref, w1_ref, b1_ref, wmulv_ref, bmulv_ref, eps_ref,
                wd1_ref, bd1_ref, wd2_ref, bd2_ref,
                out_ref, mulv_ref):
    """One batch tile of the fused VAE forward pass (all feature dims 128-padded)."""
    wdt = w1_ref.dtype                                   # matmul operand dtype (f32 or bf16)

    # ---- Encoder: Linear -> ReLU ----
    x = x_ref[...].astype(wdt)                           # (TB, Dp)
    h = jnp.dot(x, w1_ref[...], preferred_element_type=jnp.float32) + b1_ref[...]
    h = jnp.maximum(h, 0.0)                              # (TB, Hp), f32

    # ---- Fused (mu | log_var) projection: one lane-dense (TB, 2*Zp) output ----
    mulv = jnp.dot(h.astype(wdt), wmulv_ref[...],
                   preferred_element_type=jnp.float32) + bmulv_ref[...]
    mulv_ref[...] = mulv

    zp = mulv.shape[-1] // 2                             # 128-aligned split, no lane shuffle
    mu = mulv[:, :zp]
    lv = mulv[:, zp:]

    # ---- Reparameterization: z = mu + eps * exp(log_var / 2) ----
    # Padded latent columns: mu = lv = 0 and eps = 0 there, so z stays exactly 0.
    z = mu + eps_ref[...] * jnp.exp(lv * 0.5)            # (TB, Zp), f32 (exp on EUP)

    # ---- Decoder: Linear -> ReLU -> Linear -> sigmoid ----
    hd = jnp.dot(z.astype(wdt), wd1_ref[...],
                 preferred_element_type=jnp.float32) + bd1_ref[...]
    hd = jnp.maximum(hd, 0.0)                            # (TB, Hp), f32
    logits = jnp.dot(hd.astype(wdt), wd2_ref[...],
                     preferred_element_type=jnp.float32) + bd2_ref[...]
    out_ref[...] = jax.nn.sigmoid(logits)                # (TB, Dp), f32


def _pad2(a, rows, cols):
    r, c = a.shape
    return jnp.zeros((rows, cols), a.dtype).at[:r, :c].set(a)


def pack_vae_params(params, image_shape, z_dim, hidden_dim=400,
                    weights_dtype=jnp.float32):
    """Zero-pad all feature dims to multiples of 128, fuse mu|log_var weights,
    and (optionally) cast weights to bf16. Biases stay f32 (added to f32 acc)."""
    (w1, b1, wmu, bmu, wlv, blv, wd1, bd1, wd2, bd2) = params
    D = int(np.prod(image_shape))
    Dp = _round_up(D, 128)
    Hp = _round_up(hidden_dim, 128)
    Zp = _round_up(z_dim, 128)

    w1p = _pad2(w1, Dp, Hp).astype(weights_dtype)
    b1p = _pad2(b1, 1, Hp).astype(jnp.float32)
    wmulv = jnp.concatenate([_pad2(wmu, Hp, Zp), _pad2(wlv, Hp, Zp)],
                            axis=1).astype(weights_dtype)
    bmulv = jnp.concatenate([_pad2(bmu, 1, Zp), _pad2(blv, 1, Zp)],
                            axis=1).astype(jnp.float32)
    wd1p = _pad2(wd1, Zp, Hp).astype(weights_dtype)
    bd1p = _pad2(bd1, 1, Hp).astype(jnp.float32)
    wd2p = _pad2(wd2, Hp, Dp).astype(weights_dtype)
    bd2p = _pad2(bd2, 1, Dp).astype(jnp.float32)
    return (w1p, b1p, wmulv, bmulv, wd1p, bd1p, wd2p, bd2p)


@functools.partial(jax.jit, static_argnames=("image_shape", "z_dim", "block_batch"))
def vae_forward(x_nchw, packed_params, eps, *, image_shape, z_dim, block_batch=128):
    """x_nchw: (B, C, H, W) f32.  packed_params: output of pack_vae_params.
    eps: (B, z_dim) reparameterization noise.  Returns (out_img NCHW, mu, log_var)."""
    (w1, b1, wmulv, bmulv, wd1, bd1, wd2, bd2) = packed_params
    B = x_nchw.shape[0]
    D = int(np.prod(image_shape))
    Dp, Hp = w1.shape
    Zp2 = wmulv.shape[1]
    Zp = Zp2 // 2

    # Batch tile: multiple of 8 sublanes, capped at block_batch for throughput runs.
    TB = min(block_batch, _round_up(B, 8))
    Bp = _round_up(B, TB)
    grid = (Bp // TB,)

    x_flat = x_nchw.reshape(B, D).astype(jnp.float32)
    xp = jnp.zeros((Bp, Dp), jnp.float32).at[:B, :D].set(x_flat)
    epsp = jnp.zeros((Bp, Zp), jnp.float32).at[:B, :z_dim].set(eps.astype(jnp.float32))

    # Batch-tiled specs for x/eps/outputs; constant index_map keeps weights resident.
    def tiled(f):
        return pl.BlockSpec((TB, f), lambda i: (i, 0))

    def resident(shape):
        return pl.BlockSpec(shape, lambda i: (0,) * len(shape))

    in_specs = [
        tiled(Dp),             # x tile
        resident((Dp, Hp)),    # w1
        resident((1, Hp)),     # b1
        resident((Hp, Zp2)),   # wmu|wlv fused
        resident((1, Zp2)),    # bmu|blv fused
        tiled(Zp),             # eps tile
        resident((Zp, Hp)),    # wd1
        resident((1, Hp)),     # bd1
        resident((Hp, Dp)),    # wd2
        resident((1, Dp)),     # bd2
    ]
    out_specs = (tiled(Dp), tiled(Zp2))

    # VMEM budget: weights (counted double-buffered, conservative) + double-buffered
    # batch tiles, clamped to fit even v7x's 64 MiB per-TC VMEM.
    weight_bytes = sum(int(np.prod(a.shape)) * a.dtype.itemsize
                       for a in (w1, b1, wmulv, bmulv, wd1, bd1, wd2, bd2))
    tile_bytes = TB * (Dp + Zp + Dp + Zp2) * 4
    vmem_limit = int(min(60 * 2**20, max(32 * 2**20, 2 * (weight_bytes + 2 * tile_bytes))))

    # Advisory cost estimate so XLA schedules neighbors sensibly around the call.
    flops = 2 * Bp * (Dp * Hp + Hp * Zp2 + Zp * Hp + Hp * Dp)
    transcendentals = Bp * (Zp + Dp)                      # exp + sigmoid
    bytes_accessed = weight_bytes + (Bp * (Dp + Zp) + Bp * (Dp + Zp2)) * 4

    out_flat, mulv = pl.pallas_call(
        _vae_kernel,
        out_shape=(
            jax.ShapeDtypeStruct((Bp, Dp), jnp.float32),
            jax.ShapeDtypeStruct((Bp, Zp2), jnp.float32),
        ),
        grid=grid,
        in_specs=in_specs,
        out_specs=out_specs,
        compiler_params=pltpu.CompilerParams(
            dimension_semantics=("parallel",),
            vmem_limit_bytes=vmem_limit,
        ),
        cost_estimate=pl.CostEstimate(
            flops=flops,
            transcendentals=transcendentals,
            bytes_accessed=bytes_accessed,
        ),
    )(xp, w1, b1, wmulv, bmulv, epsp, wd1, bd1, wd2, bd2)

    out_img = out_flat[:B, :D].reshape((B,) + image_shape)
    mu = mulv[:B, :z_dim]
    log_var = mulv[:B, Zp:Zp + z_dim]
    return out_img, mu, log_var


def init_vae_params(key, image_shape, z_dim, hidden_dim=400):
    """Deterministic init mimicking nn.Linear default (uniform +/- 1/sqrt(fan_in)).
    Weights are stored transposed: (in_features, out_features)."""
    D = int(np.prod(image_shape))

    def linear(key, fan_in, fan_out):
        kw, kb = jax.random.split(key)
        bound = 1.0 / np.sqrt(fan_in)
        w = jax.random.uniform(kw, (fan_in, fan_out), jnp.float32, -bound, bound)
        b = jax.random.uniform(kb, (1, fan_out), jnp.float32, -bound, bound)
        return w, b

    k1, k2, k3, k4, k5 = jax.random.split(key, 5)
    w1, b1 = linear(k1, D, hidden_dim)          # encoder.linear
    wmu, bmu = linear(k2, hidden_dim, z_dim)    # encoder.mu
    wlv, blv = linear(k3, hidden_dim, z_dim)    # encoder.log_var
    wd1, bd1 = linear(k4, z_dim, hidden_dim)    # decoder.linear
    wd2, bd2 = linear(k5, hidden_dim, D)        # decoder.recon
    return (w1, b1, wmu, bmu, wlv, blv, wd1, bd1, wd2, bd2)


def vae_forward_ref(x_nchw, params, eps, image_shape):
    """Pure-JAX reference (unpadded, f32) for correctness check."""
    B = x_nchw.shape[0]
    D = int(np.prod(image_shape))
    x = x_nchw.reshape(B, D)
    (w1, b1, wmu, bmu, wlv, blv, wd1, bd1, wd2, bd2) = params
    h = jnp.maximum(x @ w1 + b1, 0.0)
    mu = h @ wmu + bmu
    lv = h @ wlv + blv
    z = mu + eps * jnp.exp(lv / 2.0)
    hd = jnp.maximum(z @ wd1 + bd1, 0.0)
    recon = jax.nn.sigmoid(hd @ wd2 + bd2)
    return recon.reshape((B,) + image_shape), mu, lv


if __name__ == "__main__":
    # Small shapes consistent with the module: batch=2, image_shape=(1,16,16), z_dim=8.
    image_shape = (1, 16, 16)
    z_dim = 8
    hidden_dim = 400
    batch = 2

    key = jax.random.PRNGKey(0)
    k_x, k_eps, k_params = jax.random.split(key, 3)

    x = jax.random.uniform(k_x, (batch,) + image_shape, jnp.float32)   # NCHW input
    eps = jax.random.normal(k_eps, (batch, z_dim), jnp.float32)        # reparam noise
    params = init_vae_params(k_params, image_shape, z_dim, hidden_dim)

    out_ref, mu_ref, lv_ref = vae_forward_ref(x, params, eps, image_shape)

    # --- f32-weight path: tight check against pure-JAX reference ---
    packed_f32 = pack_vae_params(params, image_shape, z_dim, hidden_dim, jnp.float32)
    out_img, mu, log_var = vae_forward(x, packed_f32, eps,
                                       image_shape=image_shape, z_dim=z_dim)
    jax.block_until_ready((out_img, mu, log_var))
    np.testing.assert_allclose(np.asarray(out_img), np.asarray(out_ref), rtol=1e-5, atol=1e-5)
    np.testing.assert_allclose(np.asarray(mu), np.asarray(mu_ref), rtol=1e-5, atol=1e-5)
    np.testing.assert_allclose(np.asarray(log_var), np.asarray(lv_ref), rtol=1e-5, atol=1e-5)

    # --- bf16-weight path (MXU bf16 operands, f32 accumulation): loose check ---
    packed_bf16 = pack_vae_params(params, image_shape, z_dim, hidden_dim, jnp.bfloat16)
    out_b, mu_b, lv_b = vae_forward(x, packed_bf16, eps,
                                    image_shape=image_shape, z_dim=z_dim)
    jax.block_until_ready((out_b, mu_b, lv_b))
    np.testing.assert_allclose(np.asarray(out_b), np.asarray(out_ref), rtol=1e-1, atol=1e-1)
    np.testing.assert_allclose(np.asarray(mu_b), np.asarray(mu_ref), rtol=1e-1, atol=1e-1)
    np.testing.assert_allclose(np.asarray(lv_b), np.asarray(lv_ref), rtol=1e-1, atol=1e-1)

    assert out_img.shape == (batch,) + image_shape
    assert mu.shape == (batch, z_dim) and log_var.shape == (batch, z_dim)
    print("KERNEL_OK")
</pallas_src>

<mosaic_0001>
module attributes {stable_mosaic.version = 11 : i64} {
  func.func @_vae_kernel(%arg0: i32, %arg1: memref<8x256xf32, #tpu.memory_space<vmem>>, %arg2: memref<256x512xf32, #tpu.memory_space<vmem>>, %arg3: memref<1x512xf32, #tpu.memory_space<vmem>>, %arg4: memref<512x256xf32, #tpu.memory_space<vmem>>, %arg5: memref<1x256xf32, #tpu.memory_space<vmem>>, %arg6: memref<8x128xf32, #tpu.memory_space<vmem>>, %arg7: memref<128x512xf32, #tpu.memory_space<vmem>>, %arg8: memref<1x512xf32, #tpu.memory_space<vmem>>, %arg9: memref<512x256xf32, #tpu.memory_space<vmem>>, %arg10: memref<1x256xf32, #tpu.memory_space<vmem>>, %arg11: memref<8x256xf32, #tpu.memory_space<vmem>>, %arg12: memref<8x256xf32, #tpu.memory_space<vmem>>) attributes {dimension_semantics = [#tpu.dimension_semantics<parallel>], iteration_bounds = array<i64: 1>, scalar_prefetch = 0 : i64, scratch_operands = 0 : i64, tpu.core_type = #tpu.core_type<tc>, window_params = [{transform_indices = @transform_0, window_bounds = array<i64: 8, 256>}, {pipeline_mode = #tpu.pipeline_mode<synchronous>, transform_indices = @transform_1, window_bounds = array<i64: 256, 512>}, {pipeline_mode = #tpu.pipeline_mode<synchronous>, transform_indices = @transform_2, window_bounds = array<i64: 1, 512>}, {pipeline_mode = #tpu.pipeline_mode<synchronous>, transform_indices = @transform_3, window_bounds = array<i64: 512, 256>}, {pipeline_mode = #tpu.pipeline_mode<synchronous>, transform_indices = @transform_4, window_bounds = array<i64: 1, 256>}, {transform_indices = @transform_5, window_bounds = array<i64: 8, 128>}, {pipeline_mode = #tpu.pipeline_mode<synchronous>, transform_indices = @transform_6, window_bounds = array<i64: 128, 512>}, {pipeline_mode = #tpu.pipeline_mode<synchronous>, transform_indices = @transform_7, window_bounds = array<i64: 1, 512>}, {pipeline_mode = #tpu.pipeline_mode<synchronous>, transform_indices = @transform_8, window_bounds = array<i64: 512, 256>}, {pipeline_mode = #tpu.pipeline_mode<synchronous>, transform_indices = @transform_9, window_bounds = array<i64: 1, 256>}, {transform_indices = @transform_10, window_bounds = array<i64: 8, 256>}, {transform_indices = @transform_11, window_bounds = array<i64: 8, 256>}]} {
    %c0 = arith.constant 0 : index
    %c0_0 = arith.constant 0 : index
    %0 = vector.load %arg1[%c0, %c0_0] : memref<8x256xf32, #tpu.memory_space<vmem>>, vector<8x256xf32>
    %c0_1 = arith.constant 0 : index
    %c0_2 = arith.constant 0 : index
    %1 = vector.load %arg2[%c0_1, %c0_2] : memref<256x512xf32, #tpu.memory_space<vmem>>, vector<256x512xf32>
    %cst = arith.constant dense<0.000000e+00> : vector<8x512xf32>
    %2 = tpu.matmul %0, %1, %cst {dimension_numbers = #tpu.dot_dimension_numbers<[1], [0], [0], [1], [0, 0, 1, 1], [], []>} : vector<8x256xf32>, vector<256x512xf32>, vector<8x512xf32> -> vector<8x512xf32>
    %c0_3 = arith.constant 0 : index
    %c0_4 = arith.constant 0 : index
    %3 = vector.load %arg3[%c0_3, %c0_4] : memref<1x512xf32, #tpu.memory_space<vmem>>, vector<1x512xf32>
    %4 = vector.broadcast %3 : vector<1x512xf32> to vector<8x512xf32>
    %5 = arith.addf %2, %4 : vector<8x512xf32>
    %cst_5 = arith.constant 0.000000e+00 : f32
    %6 = vector.broadcast %cst_5 : f32 to vector<8x512xf32>
    %7 = arith.maximumf %5, %6 : vector<8x512xf32>
    %c0_6 = arith.constant 0 : index
    %c0_7 = arith.constant 0 : index
    %8 = vector.load %arg4[%c0_6, %c0_7] : memref<512x256xf32, #tpu.memory_space<vmem>>, vector<512x256xf32>
    %cst_8 = arith.constant dense<0.000000e+00> : vector<8x256xf32>
    %9 = tpu.matmul %7, %8, %cst_8 {dimension_numbers = #tpu.dot_dimension_numbers<[1], [0], [0], [1], [0, 0, 1, 1], [], []>} : vector<8x512xf32>, vector<512x256xf32>, vector<8x256xf32> -> vector<8x256xf32>
    %c0_9 = arith.constant 0 : index
    %c0_10 = arith.constant 0 : index
    %10 = vector.load %arg5[%c0_9, %c0_10] : memref<1x256xf32, #tpu.memory_space<vmem>>, vector<1x256xf32>
    %11 = vector.broadcast %10 : vector<1x256xf32> to vector<8x256xf32>
    %12 = arith.addf %9, %11 : vector<8x256xf32>
    %c0_11 = arith.constant 0 : index
    %c0_12 = arith.constant 0 : index
    %13 = vector.load %arg12[%c0_11, %c0_12] : memref<8x256xf32, #tpu.memory_space<vmem>>, vector<8x256xf32>
    tpu.vector_store %arg12[%c0_11, %c0_12], %12 {strides = array<i32>} : memref<8x256xf32, #tpu.memory_space<vmem>>, vector<8x256xf32>,
    %14 = vector.extract_strided_slice %12 {offsets = [0, 0], sizes = [8, 128], strides = [1, 1]} : vector<8x256xf32> to vector<8x128xf32>
    %15 = vector.extract_strided_slice %12 {offsets = [0, 128], sizes = [8, 128], strides = [1, 1]} : vector<8x256xf32> to vector<8x128xf32>
    %c0_13 = arith.constant 0 : index
    %c0_14 = arith.constant 0 : index
    %16 = vector.load %arg6[%c0_13, %c0_14] : memref<8x128xf32, #tpu.memory_space<vmem>>, vector<8x128xf32>
    %cst_15 = arith.constant 5.000000e-01 : f32
    %17 = vector.broadcast %cst_15 : f32 to vector<8x128xf32>
    %18 = arith.mulf %15, %17 : vector<8x128xf32>
    %19 = math.exp %18 : vector<8x128xf32>
    %20 = arith.mulf %16, %19 : vector<8x128xf32>
    %21 = arith.addf %14, %20 : vector<8x128xf32>
    %c0_16 = arith.constant 0 : index
    %c0_17 = arith.constant 0 : index
    %22 = vector.load %arg7[%c0_16, %c0_17] : memref<128x512xf32, #tpu.memory_space<vmem>>, vector<128x512xf32>
    %cst_18 = arith.constant dense<0.000000e+00> : vector<8x512xf32>
    %23 = tpu.matmul %21, %22, %cst_18 {dimension_numbers = #tpu.dot_dimension_numbers<[1], [0], [0], [1], [0, 0, 1, 1], [], []>} : vector<8x128xf32>, vector<128x512xf32>, vector<8x512xf32> -> vector<8x512xf32>
    %c0_19 = arith.constant 0 : index
    %c0_20 = arith.constant 0 : index
    %24 = vector.load %arg8[%c0_19, %c0_20] : memref<1x512xf32, #tpu.memory_space<vmem>>, vector<1x512xf32>
    %25 = vector.broadcast %24 : vector<1x512xf32> to vector<8x512xf32>
    %26 = arith.addf %23, %25 : vector<8x512xf32>
    %cst_21 = arith.constant 0.000000e+00 : f32
    %27 = vector.broadcast %cst_21 : f32 to vector<8x512xf32>
    %28 = arith.maximumf %26, %27 : vector<8x512xf32>
    %c0_22 = arith.constant 0 : index
    %c0_23 = arith.constant 0 : index
    %29 = vector.load %arg9[%c0_22, %c0_23] : memref<512x256xf32, #tpu.memory_space<vmem>>, vector<512x256xf32>
    %cst_24 = arith.constant dense<0.000000e+00> : vector<8x256xf32>
    %30 = tpu.matmul %28, %29, %cst_24 {dimension_numbers = #tpu.dot_dimension_numbers<[1], [0], [0], [1], [0, 0, 1, 1], [], []>} : vector<8x512xf32>, vector<512x256xf32>, vector<8x256xf32> -> vector<8x256xf32>
    %c0_25 = arith.constant 0 : index
    %c0_26 = arith.constant 0 : index
    %31 = vector.load %arg10[%c0_25, %c0_26] : memref<1x256xf32, #tpu.memory_space<vmem>>, vector<1x256xf32>
    %32 = vector.broadcast %31 : vector<1x256xf32> to vector<8x256xf32>
    %33 = arith.addf %30, %32 : vector<8x256xf32>
    %34 = arith.negf %33 : vector<8x256xf32>
    %35 = math.exp %34 : vector<8x256xf32>
    %cst_27 = arith.constant 1.000000e+00 : f32
    %36 = vector.broadcast %cst_27 : f32 to vector<8x256xf32>
    %37 = arith.addf %36, %35 : vector<8x256xf32>
    %38 = arith.divf %36, %37 : vector<8x256xf32>
    %c0_28 = arith.constant 0 : index
    %c0_29 = arith.constant 0 : index
    %39 = vector.load %arg11[%c0_28, %c0_29] : memref<8x256xf32, #tpu.memory_space<vmem>>, vector<8x256xf32>
    tpu.vector_store %arg11[%c0_28, %c0_29], %38 {strides = array<i32>} : memref<8x256xf32, #tpu.memory_space<vmem>>, vector<8x256xf32>,
    return
  }
  func.func @transform_0(%arg0: i32) -> (i32, i32) {
    %c0_i32 = arith.constant 0 : i32
    %c0_i32_0 = arith.constant 0 : i32
    return %arg0, %c0_i32 : i32, i32
  }
  func.func @transform_1(%arg0: i32) -> (i32, i32) {
    %c0_i32 = arith.constant 0 : i32
    %c0_i32_0 = arith.constant 0 : i32
    %c0_i32_1 = arith.constant 0 : i32
    return %c0_i32, %c0_i32_0 : i32, i32
  }
  func.func @transform_2(%arg0: i32) -> (i32, i32) {
    %c0_i32 = arith.constant 0 : i32
    %c0_i32_0 = arith.constant 0 : i32
    %c0_i32_1 = arith.constant 0 : i32
    return %c0_i32, %c0_i32_0 : i32, i32
  }
  func.func @transform_3(%arg0: i32) -> (i32, i32) {
    %c0_i32 = arith.constant 0 : i32
    %c0_i32_0 = arith.constant 0 : i32
    %c0_i32_1 = arith.constant 0 : i32
    return %c0_i32, %c0_i32_0 : i32, i32
  }
  func.func @transform_4(%arg0: i32) -> (i32, i32) {
    %c0_i32 = arith.constant 0 : i32
    %c0_i32_0 = arith.constant 0 : i32
    %c0_i32_1 = arith.constant 0 : i32
    return %c0_i32, %c0_i32_0 : i32, i32
  }
  func.func @transform_5(%arg0: i32) -> (i32, i32) {
    %c0_i32 = arith.constant 0 : i32
    %c0_i32_0 = arith.constant 0 : i32
    return %arg0, %c0_i32 : i32, i32
  }
  func.func @transform_6(%arg0: i32) -> (i32, i32) {
    %c0_i32 = arith.constant 0 : i32
    %c0_i32_0 = arith.constant 0 : i32
    %c0_i32_1 = arith.constant 0 : i32
    return %c0_i32, %c0_i32_0 : i32, i32
  }
  func.func @transform_7(%arg0: i32) -> (i32, i32) {
    %c0_i32 = arith.constant 0 : i32
    %c0_i32_0 = arith.constant 0 : i32
    %c0_i32_1 = arith.constant 0 : i32
    return %c0_i32, %c0_i32_0 : i32, i32
  }
  func.func @transform_8(%arg0: i32) -> (i32, i32) {
    %c0_i32 = arith.constant 0 : i32
    %c0_i32_0 = arith.constant 0 : i32
    %c0_i32_1 = arith.constant 0 : i32
    return %c0_i32, %c0_i32_0 : i32, i32
  }
  func.func @transform_9(%arg0: i32) -> (i32, i32) {
    %c0_i32 = arith.constant 0 : i32
    %c0_i32_0 = arith.constant 0 : i32
    %c0_i32_1 = arith.constant 0 : i32
    return %c0_i32, %c0_i32_0 : i32, i32
  }
  func.func @transform_10(%arg0: i32) -> (i32, i32) {
    %c0_i32 = arith.constant 0 : i32
    %c0_i32_0 = arith.constant 0 : i32
    return %arg0, %c0_i32 : i32, i32
  }
  func.func @transform_11(%arg0: i32) -> (i32, i32) {
    %c0_i32 = arith.constant 0 : i32
    %c0_i32_0 = arith.constant 0 : i32
    return %arg0, %c0_i32 : i32, i32
  }
}

</mosaic_0001>

<llo_original>
// kernel: vae_forward.1
$region0: #{vae_forward.1}
  #allocation0 [shape = 'u32[]', space=smem, size = 0x4, offset = 0x4, fixed_abs, tag = 'smem constant byte address 0x4 - core index']
  #allocation1 [shape = 'u32[72,128]{1,0:T(1,128)}', space=vmem, size = 0x9000, scoped, tag = 'internal scratch']
  %s0 = inlined_call_operand.vmem [shape: f32[8,256], index: 0, kind: input, shape index: {}]
  %s1 = inlined_call_operand.hbm [shape: f32[256,512], index: 1, kind: input, shape index: {}]
  %s2 = inlined_call_operand.vmem [shape: f32[1,512], index: 2, kind: input, shape index: {}]
  %s3 = inlined_call_operand.hbm [shape: f32[512,256], index: 3, kind: input, shape index: {}]
  %s4 = inlined_call_operand.vmem [shape: f32[1,256], index: 4, kind: input, shape index: {}]
  %s5 = inlined_call_operand.vmem [shape: f32[8,128], index: 5, kind: input, shape index: {}]
  %s6 = inlined_call_operand.hbm [shape: f32[128,512], index: 6, kind: input, shape index: {}]
  %s7 = inlined_call_operand.vmem [shape: f32[1,512], index: 7, kind: input, shape index: {}]
  %s8 = inlined_call_operand.hbm [shape: f32[512,256], index: 8, kind: input, shape index: {}]
  %s9 = inlined_call_operand.vmem [shape: f32[1,256], index: 9, kind: input, shape index: {}]
  %s10 = inlined_call_operand.vmem [shape: f32[8,256], index: 10, kind: output, shape index: {0}]
  %s11 = inlined_call_operand.vmem [shape: f32[8,256], index: 11, kind: output, shape index: {1}]
  %12 = xla_tuple %s10, %s11
  %s13 = sld [smem:[#allocation0]]
  $region74: #{vae_forward.1} parent=0
    _
  %s15 = ssub.s32 1, %s13
  %s16 = scalar_select 0, %s15, %s13
  $region1: #{vae_forward.1} parent=0
    #allocation2 [shape = 'u8[524288]{0}', space=vmem, size = 0x80000, scoped, tag = 'input window, operand 1, single buffered']
    #allocation3 [shape = 's32[1]{0}', space=sflag, size = 0x4, scoped, tag = 'scoped memory for vae_forward.1']
    #allocation4 [shape = 'u8[524288]{0}', space=vmem, size = 0x80000, scoped, tag = 'input window, operand 3, single buffered']
    #allocation5 [shape = 's32[1]{0}', space=sflag, size = 0x4, scoped, tag = 'scoped memory for vae_forward.1']
    #allocation6 [shape = 'u8[262144]{0}', space=vmem, size = 0x40000, scoped, tag = 'input window, operand 6, single buffered']
    #allocation7 [shape = 'u8[524288]{0}', space=vmem, size = 0x80000, scoped, tag = 'input window, operand 8, single buffered']
    #allocation8 [shape = 's32[1]{0}', space=sflag, size = 0x4, scoped, tag = 'scoped memory for vae_forward.1']
    %17 = vsyncpa [#allocation3], 0
    %18 = vsyncpa [#allocation5], 0
    %19 = vsyncpa [#allocation8], 0
    // Predicated region
    $region2: #{vae_forward.1} parent=1 // pred_check
      _
    $region3: #{vae_forward.1} parent=1 // pred_check_branch
      %21 = sbr.rel (0) target = $region5
    $region4: #{vae_forward.1} parent=1 // pred_region
      _
    $region5: #{vae_forward.1} parent=1 // pred_fallthru
      _
    // Predicated region
    $region6: #{vae_forward.1} parent=1 // pred_check
      _
    $region7: #{vae_forward.1} parent=1 // pred_check_branch
      %23 = sbr.rel (0) target = $region9
    $region8: #{vae_forward.1} parent=1 // pred_region
      %25 = vsyncadd [#allocation3], 0
      %s26 = sshll.u32 %s1, 4
      %s27 = int_to_ptr.hbm [resolvable:$true] %s26
      %s28 = sshll.u32 [#allocation2], 4
      %s29 = int_to_ptr.vmem [resolvable:$true] %s28
      %34 = dma.hbm_to_vmem [thread:$0]  %s27, 16384, %s29, [#allocation3], 512, 512, 32
    $region9: #{vae_forward.1} parent=1 // pred_fallthru
      _
    // Predicated region
    $region10: #{vae_forward.1} parent=1 // pred_check
      _
    $region11: #{vae_forward.1} parent=1 // pred_check_branch
      %36 = sbr.rel (0) target = $region13
    $region12: #{vae_forward.1} parent=1 // pred_region
      _
    $region13: #{vae_forward.1} parent=1 // pred_fallthru
      _
    // Predicated region
    $region14: #{vae_forward.1} parent=1 // pred_check
      _
    $region15: #{vae_forward.1} parent=1 // pred_check_branch
      %38 = sbr.rel (0) target = $region17
    $region16: #{vae_forward.1} parent=1 // pred_region
      %40 = vsyncadd [#allocation5], 0
      %s41 = sshll.u32 %s3, 4
      %s42 = int_to_ptr.hbm [resolvable:$true] %s41
      %s43 = sshll.u32 [#allocation4], 4
      %s44 = int_to_ptr.vmem [resolvable:$true] %s43
      %49 = dma.hbm_to_vmem [thread:$0]  %s42, 16384, %s44, [#allocation5], 256, 256, 16
    $region17: #{vae_forward.1} parent=1 // pred_fallthru
      _
    // Predicated region
    $region18: #{vae_forward.1} parent=1 // pred_check
      _
    $region19: #{vae_forward.1} parent=1 // pred_check_branch
      %51 = sbr.rel (0) target = $region21
    $region20: #{vae_forward.1} parent=1 // pred_region
      _
    $region21: #{vae_forward.1} parent=1 // pred_fallthru
      _
    // Predicated region
    $region22: #{vae_forward.1} parent=1 // pred_check
      _
    $region23: #{vae_forward.1} parent=1 // pred_check_branch
      %53 = sbr.rel (0) target = $region25
    $region24: #{vae_forward.1} parent=1 // pred_region
      _
    $region25: #{vae_forward.1} parent=1 // pred_fallthru
      _
    // Predicated region
    $region26: #{vae_forward.1} parent=1 // pred_check
      _
    $region27: #{vae_forward.1} parent=1 // pred_check_branch
      %55 = sbr.rel (0) target = $region29
    $region28: #{vae_forward.1} parent=1 // pred_region
      %57 = vsyncadd [#allocation5], 0
      %s58 = sshll.u32 %s6, 4
      %s59 = int_to_ptr.hbm [resolvable:$true] %s58
      %s60 = sshll.u32 [#allocation6], 4
      %s61 = int_to_ptr.vmem [resolvable:$true] %s60
      %66 = dma.hbm_to_vmem [thread:$0]  %s59, 8192, %s61, [#allocation5], 512, 512, 32
    $region29: #{vae_forward.1} parent=1 // pred_fallthru
      _
    // Predicated region
    $region30: #{vae_forward.1} parent=1 // pred_check
      _
    $region31: #{vae_forward.1} parent=1 // pred_check_branch
      %68 = sbr.rel (0) target = $region33
    $region32: #{vae_forward.1} parent=1 // pred_region
      _
    $region33: #{vae_forward.1} parent=1 // pred_fallthru
      _
    // Predicated region
    $region34: #{vae_forward.1} parent=1 // pred_check
      _
    $region35: #{vae_forward.1} parent=1 // pred_check_branch
      %70 = sbr.rel (0) target = $region37
    $region36: #{vae_forward.1} parent=1 // pred_region
      %72 = vsyncadd [#allocation8], 0
      %s73 = sshll.u32 %s8, 4
      %s74 = int_to_ptr.hbm [resolvable:$true] %s73
      %s75 = sshll.u32 [#allocation7], 4
      %s76 = int_to_ptr.vmem [resolvable:$true] %s75
      %81 = dma.hbm_to_vmem [thread:$0]  %s74, 16384, %s76, [#allocation8], 256, 256, 16
    $region37: #{vae_forward.1} parent=1 // pred_fallthru
      _
    // Predicated region
    $region38: #{vae_forward.1} parent=1 // pred_check
      _
    $region39: #{vae_forward.1} parent=1 // pred_check_branch
      %83 = sbr.rel (0) target = $region41
    $region40: #{vae_forward.1} parent=1 // pred_region
      _
    $region41: #{vae_forward.1} parent=1 // pred_fallthru
      _
    // Predicated region
    $region42: #{vae_forward.1} parent=1 // pred_check
      _
    $region43: #{vae_forward.1} parent=1 // pred_check_branch
      %85 = sbr.rel (0) target = $region45
    $region44: #{vae_forward.1} parent=1 // pred_region
      %87 = dma.done [#allocation3], 16384
    $region45: #{vae_forward.1} parent=1 // pred_fallthru
      _
    // Predicated region
    $region46: #{vae_forward.1} parent=1 // pred_check
      _
    $region47: #{vae_forward.1} parent=1 // pred_check_branch
      %89 = sbr.rel (0) target = $region49
    $region48: #{vae_forward.1} parent=1 // pred_region
      %91 = dma.done [#allocation5], 16384
    $region49: #{vae_forward.1} parent=1 // pred_fallthru
      _
    // Predicated region
    $region50: #{vae_forward.1} parent=1 // pred_check
      _
    $region51: #{vae_forward.1} parent=1 // pred_check_branch
      %93 = sbr.rel (0) target = $region53
    $region52: #{vae_forward.1} parent=1 // pred_region
      %95 = dma.done [#allocation5], 8192
    $region53: #{vae_forward.1} parent=1 // pred_fallthru
      _
    // Predicated region
    $region54: #{vae_forward.1} parent=1 // pred_check
      _
    $region55: #{vae_forward.1} parent=1 // pred_check_branch
      %97 = sbr.rel (0) target = $region57
    $region56: #{vae_forward.1} parent=1 // pred_region
      %99 = dma.done [#allocation8], 16384
    $region57: #{vae_forward.1} parent=1 // pred_fallthru
      _
    %v100 = vld [vmem:[%s0] sm:$0xff]
    %v101 = vld [vmem:[%s0 + $0x8] sm:$0xff]
    %v102 = vld [vmem:[#allocation2] sm:$0xff]
    %v103 = vld [vmem:[#allocation2 + $0x8] sm:$0xff]
    %v104 = vld [vmem:[#allocation2 + $0x10] sm:$0xff]
    %v105 = vld [vmem:[#allocation2 + $0x18] sm:$0xff]
    %v106 = vld [vmem:[#allocation2 + $0x20] sm:$0xff]
    %v107 = vld [vmem:[#allocation2 + $0x28] sm:$0xff]
    %v108 = vld [vmem:[#allocation2 + $0x30] sm:$0xff]
    %v109 = vld [vmem:[#allocation2 + $0x38] sm:$0xff]
    %v110 = vld [vmem:[#allocation2 + $0x40] sm:$0xff]
    %v111 = vld [vmem:[#allocation2 + $0x48] sm:$0xff]
    %v112 = vld [vmem:[#allocation2 + $0x50] sm:$0xff]
    %v113 = vld [vmem:[#allocation2 + $0x58] sm:$0xff]
    %v114 = vld [vmem:[#allocation2 + $0x60] sm:$0xff]
    %v115 = vld [vmem:[#allocation2 + $0x68] sm:$0xff]
    %v116 = vld [vmem:[#allocation2 + $0x70] sm:$0xff]
    %v117 = vld [vmem:[#allocation2 + $0x78] sm:$0xff]
    %v118 = vld [vmem:[#allocation2 + $0x80] sm:$0xff]
    %v119 = vld [vmem:[#allocation2 + $0x88] sm:$0xff]
    %v120 = vld [vmem:[#allocation2 + $0x90] sm:$0xff]
    %v121 = vld [vmem:[#allocation2 + $0x98] sm:$0xff]
    %v122 = vld [vmem:[#allocation2 + $0xa0] sm:$0xff]
    %v123 = vld [vmem:[#allocation2 + $0xa8] sm:$0xff]
    %v124 = vld [vmem:[#allocation2 + $0xb0] sm:$0xff]
    %v125 = vld [vmem:[#allocation2 + $0xb8] sm:$0xff]
    %v126 = vld [vmem:[#allocation2 + $0xc0] sm:$0xff]
    %v127 = vld [vmem:[#allocation2 + $0xc8] sm:$0xff]
    %v128 = vld [vmem:[#allocation2 + $0xd0] sm:$0xff]
    %v129 = vld [vmem:[#allocation2 + $0xd8] sm:$0xff]
    %v130 = vld [vmem:[#allocation2 + $0xe0] sm:$0xff]
    %v131 = vld [vmem:[#allocation2 + $0xe8] sm:$0xff]
    %v132 = vld [vmem:[#allocation2 + $0xf0] sm:$0xff]
    %v133 = vld [vmem:[#allocation2 + $0xf8] sm:$0xff]
    %v134 = vld [vmem:[#allocation2 + $0x100] sm:$0xff]
    %v135 = vld [vmem:[#allocation2 + $0x108] sm:$0xff]
    %v136 = vld [vmem:[#allocation2 + $0x110] sm:$0xff]
    %v137 = vld [vmem:[#allocation2 + $0x118] sm:$0xff]
    %v138 = vld [vmem:[#allocation2 + $0x120] sm:$0xff]
    %v139 = vld [vmem:[#allocation2 + $0x128] sm:$0xff]
    %v140 = vld [vmem:[#allocation2 + $0x130] sm:$0xff]
    %v141 = vld [vmem:[#allocation2 + $0x138] sm:$0xff]
    %v142 = vld [vmem:[#allocation2 + $0x140] sm:$0xff]
    %v143 = vld [vmem:[#allocation2 + $0x148] sm:$0xff]
    %v144 = vld [vmem:[#allocation2 + $0x150] sm:$0xff]
    %v145 = vld [vmem:[#allocation2 + $0x158] sm:$0xff]
    %v146 = vld [vmem:[#allocation2 + $0x160] sm:$0xff]
    %v147 = vld [vmem:[#allocation2 + $0x168] sm:$0xff]
    %v148 = vld [vmem:[#allocation2 + $0x170] sm:$0xff]
    %v149 = vld [vmem:[#allocation2 + $0x178] sm:$0xff]
    %v150 = vld [vmem:[#allocation2 + $0x180] sm:$0xff]
    %v151 = vld [vmem:[#allocation2 + $0x188] sm:$0xff]
    %v152 = vld [vmem:[#allocation2 + $0x190] sm:$0xff]
    %v153 = vld [vmem:[#allocation2 + $0x198] sm:$0xff]
    %v154 = vld [vmem:[#allocation2 + $0x1a0] sm:$0xff]
    %v155 = vld [vmem:[#allocation2 + $0x1a8] sm:$0xff]
    %v156 = vld [vmem:[#allocation2 + $0x1b0] sm:$0xff]
    %v157 = vld [vmem:[#allocation2 + $0x1b8] sm:$0xff]
    %v158 = vld [vmem:[#allocation2 + $0x1c0] sm:$0xff]
    %v159 = vld [vmem:[#allocation2 + $0x1c8] sm:$0xff]
    %v160 = vld [vmem:[#allocation2 + $0x1d0] sm:$0xff]
    %v161 = vld [vmem:[#allocation2 + $0x1d8] sm:$0xff]
    %v162 = vld [vmem:[#allocation2 + $0x1e0] sm:$0xff]
    %v163 = vld [vmem:[#allocation2 + $0x1e8] sm:$0xff]
    %v164 = vld [vmem:[#allocation2 + $0x1f0] sm:$0xff]
    %v165 = vld [vmem:[#allocation2 + $0x1f8] sm:$0xff]
    %v166 = vld [vmem:[#allocation2 + $0x200] sm:$0xff]
    %v167 = vld [vmem:[#allocation2 + $0x208] sm:$0xff]
    %v168 = vld [vmem:[#allocation2 + $0x210] sm:$0xff]
    %v169 = vld [vmem:[#allocation2 + $0x218] sm:$0xff]
    %v170 = vld [vmem:[#allocation2 + $0x220] sm:$0xff]
    %v171 = vld [vmem:[#allocation2 + $0x228] sm:$0xff]
    %v172 = vld [vmem:[#allocation2 + $0x230] sm:$0xff]
    %v173 = vld [vmem:[#allocation2 + $0x238] sm:$0xff]
    %v174 = vld [vmem:[#allocation2 + $0x240] sm:$0xff]
    %v175 = vld [vmem:[#allocation2 + $0x248] sm:$0xff]
    %v176 = vld [vmem:[#allocation2 + $0x250] sm:$0xff]
    %v177 = vld [vmem:[#allocation2 + $0x258] sm:$0xff]
    %v178 = vld [vmem:[#allocation2 + $0x260] sm:$0xff]
    %v179 = vld [vmem:[#allocation2 + $0x268] sm:$0xff]
    %v180 = vld [vmem:[#allocation2 + $0x270] sm:$0xff]
    %v181 = vld [vmem:[#allocation2 + $0x278] sm:$0xff]
    %v182 = vld [vmem:[#allocation2 + $0x280] sm:$0xff]
    %v183 = vld [vmem:[#allocation2 + $0x288] sm:$0xff]
    %v184 = vld [vmem:[#allocation2 + $0x290] sm:$0xff]
    %v185 = vld [vmem:[#allocation2 + $0x298] sm:$0xff]
    %v186 = vld [vmem:[#allocation2 + $0x2a0] sm:$0xff]
    %v187 = vld [vmem:[#allocation2 + $0x2a8] sm:$0xff]
    %v188 = vld [vmem:[#allocation2 + $0x2b0] sm:$0xff]
    %v189 = vld [vmem:[#allocation2 + $0x2b8] sm:$0xff]
    %v190 = vld [vmem:[#allocation2 + $0x2c0] sm:$0xff]
    %v191 = vld [vmem:[#allocation2 + $0x2c8] sm:$0xff]
    %v192 = vld [vmem:[#allocation2 + $0x2d0] sm:$0xff]
    %v193 = vld [vmem:[#allocation2 + $0x2d8] sm:$0xff]
    %v194 = vld [vmem:[#allocation2 + $0x2e0] sm:$0xff]
    %v195 = vld [vmem:[#allocation2 + $0x2e8] sm:$0xff]
    %v196 = vld [vmem:[#allocation2 + $0x2f0] sm:$0xff]
    %v197 = vld [vmem:[#allocation2 + $0x2f8] sm:$0xff]
    %v198 = vld [vmem:[#allocation2 + $0x300] sm:$0xff]
    %v199 = vld [vmem:[#allocation2 + $0x308] sm:$0xff]
    %v200 = vld [vmem:[#allocation2 + $0x310] sm:$0xff]
    %v201 = vld [vmem:[#allocation2 + $0x318] sm:$0xff]
    %v202 = vld [vmem:[#allocation2 + $0x320] sm:$0xff]
    %v203 = vld [vmem:[#allocation2 + $0x328] sm:$0xff]
    %v204 = vld [vmem:[#allocation2 + $0x330] sm:$0xff]
    %v205 = vld [vmem:[#allocation2 + $0x338] sm:$0xff]
    %v206 = vld [vmem:[#allocation2 + $0x340] sm:$0xff]
    %v207 = vld [vmem:[#allocation2 + $0x348] sm:$0xff]
    %v208 = vld [vmem:[#allocation2 + $0x350] sm:$0xff]
    %v209 = vld [vmem:[#allocation2 + $0x358] sm:$0xff]
    %v210 = vld [vmem:[#allocation2 + $0x360] sm:$0xff]
    %v211 = vld [vmem:[#allocation2 + $0x368] sm:$0xff]
    %v212 = vld [vmem:[#allocation2 + $0x370] sm:$0xff]
    %v213 = vld [vmem:[#allocation2 + $0x378] sm:$0xff]
    %v214 = vld [vmem:[#allocation2 + $0x380] sm:$0xff]
    %v215 = vld [vmem:[#allocation2 + $0x388] sm:$0xff]
    %v216 = vld [vmem:[#allocation2 + $0x390] sm:$0xff]
    %v217 = vld [vmem:[#allocation2 + $0x398] sm:$0xff]
    %v218 = vld [vmem:[#allocation2 + $0x3a0] sm:$0xff]
    %v219 = vld [vmem:[#allocation2 + $0x3a8] sm:$0xff]
    %v220 = vld [vmem:[#allocation2 + $0x3b0] sm:$0xff]
    %v221 = vld [vmem:[#allocation2 + $0x3b8] sm:$0xff]
    %v222 = vld [vmem:[#allocation2 + $0x3c0] sm:$0xff]
    %v223 = vld [vmem:[#allocation2 + $0x3c8] sm:$0xff]
    %v224 = vld [vmem:[#allocation2 + $0x3d0] sm:$0xff]
    %v225 = vld [vmem:[#allocation2 + $0x3d8] sm:$0xff]
    %v226 = vld [vmem:[#allocation2 + $0x3e0] sm:$0xff]
    %v227 = vld [vmem:[#allocation2 + $0x3e8] sm:$0xff]
    %v228 = vld [vmem:[#allocation2 + $0x3f0] sm:$0xff]
    %v229 = vld [vmem:[#allocation2 + $0x3f8] sm:$0xff]
    %v230 = vld [vmem:[%s2] sm:$0xf]
    %v232 = vperm.slane %v230, 0
    %v233 = vperm.slane %v230, 1
    %v234 = vperm.slane %v230, 2
    %v235 = vperm.slane %v230, 3
    %240 = vmatpush.msra.mxu0 %v162
    %241 = vmatpush.msra.mxu0 %v158
    %242 = vmatpush.msra.mxu0 %v154
    %243 = vmatpush.msra.mxu0 %v150
    %244 = vmatpush.msra.mxu0 %v146
    %245 = vmatpush.msra.mxu0 %v142
    %246 = vmatpush.msra.mxu0 %v138
    %247 = vmatpush.msra.mxu0 %v134
    %248 = vmatpush.msra.mxu0 %v130
    %249 = vmatpush.msra.mxu0 %v126
    %250 = vmatpush.msra.mxu0 %v122
    %251 = vmatpush.msra.mxu0 %v118
    %252 = vmatpush.msra.mxu0 %v114
    %253 = vmatpush.msra.mxu0 %v110
    %254 = vmatpush.msra.mxu0 %v106
    %255 = vmatpush.msra.mxu0 %v102
    %256 = vmatmul.f32.gmra.mxu0 %v100
    %v257 = vpop.f32.mrf.mxu0
    %v258 = vadd.f32 %v232, %v257
    %259 = vdwg.mxu0
    %260 = vmatpush.msra.mxu0 %v226
    %261 = vmatpush.msra.mxu0 %v222
    %262 = vmatpush.msra.mxu0 %v218
    %263 = vmatpush.msra.mxu0 %v214
    %264 = vmatpush.msra.mxu0 %v210
    %265 = vmatpush.msra.mxu0 %v206
    %266 = vmatpush.msra.mxu0 %v202
    %267 = vmatpush.msra.mxu0 %v198
    %268 = vmatpush.msra.mxu0 %v194
    %269 = vmatpush.msra.mxu0 %v190
    %270 = vmatpush.msra.mxu0 %v186
    %271 = vmatpush.msra.mxu0 %v182
    %272 = vmatpush.msra.mxu0 %v178
    %273 = vmatpush.msra.mxu0 %v174
    %274 = vmatpush.msra.mxu0 %v170
    %275 = vmatpush.msra.mxu0 %v166
    %276 = vmatmul.f32.gmra.mxu0 %v101
    %v277 = vpop.f32.mrf.mxu0
    %v278 = vadd.f32 %v258, %v277
    %279 = vdwg.mxu0
    %280 = vmatpush.msra.mxu0 %v163
    %281 = vmatpush.msra.mxu0 %v159
    %282 = vmatpush.msra.mxu0 %v155
    %283 = vmatpush.msra.mxu0 %v151
    %284 = vmatpush.msra.mxu0 %v147
    %285 = vmatpush.msra.mxu0 %v143
    %286 = vmatpush.msra.mxu0 %v139
    %287 = vmatpush.msra.mxu0 %v135
    %288 = vmatpush.msra.mxu0 %v131
    %289 = vmatpush.msra.mxu0 %v127
    %290 = vmatpush.msra.mxu0 %v123
    %291 = vmatpush.msra.mxu0 %v119
    %292 = vmatpush.msra.mxu0 %v115
    %293 = vmatpush.msra.mxu0 %v111
    %294 = vmatpush.msra.mxu0 %v107
    %295 = vmatpush.msra.mxu0 %v103
    %296 = vmatmul.f32.gmra.mxu0 %v100
    %v297 = vpop.f32.mrf.mxu0
    %v298 = vadd.f32 %v233, %v297
    %299 = vdwg.mxu0
    %300 = vmatpush.msra.mxu0 %v227
    %301 = vmatpush.msra.mxu0 %v223
    %302 = vmatpush.msra.mxu0 %v219
    %303 = vmatpush.msra.mxu0 %v215
    %304 = vmatpush.msra.mxu0 %v211
    %305 = vmatpush.msra.mxu0 %v207
    %306 = vmatpush.msra.mxu0 %v203
    %307 = vmatpush.msra.mxu0 %v199
    %308 = vmatpush.msra.mxu0 %v195
    %309 = vmatpush.msra.mxu0 %v191
    %310 = vmatpush.msra.mxu0 %v187
    %311 = vmatpush.msra.mxu0 %v183
    %312 = vmatpush.msra.mxu0 %v179
    %313 = vmatpush.msra.mxu0 %v175
    %314 = vmatpush.msra.mxu0 %v171
    %315 = vmatpush.msra.mxu0 %v167
    %316 = vmatmul.f32.gmra.mxu0 %v101
    %v317 = vpop.f32.mrf.mxu0
    %v318 = vadd.f32 %v298, %v317
    %319 = vdwg.mxu0
    %320 = vmatpush.msra.mxu0 %v164
    %321 = vmatpush.msra.mxu0 %v160
    %322 = vmatpush.msra.mxu0 %v156
    %323 = vmatpush.msra.mxu0 %v152
    %324 = vmatpush.msra.mxu0 %v148
    %325 = vmatpush.msra.mxu0 %v144
    %326 = vmatpush.msra.mxu0 %v140
    %327 = vmatpush.msra.mxu0 %v136
    %328 = vmatpush.msra.mxu0 %v132
    %329 = vmatpush.msra.mxu0 %v128
    %330 = vmatpush.msra.mxu0 %v124
    %331 = vmatpush.msra.mxu0 %v120
    %332 = vmatpush.msra.mxu0 %v116
    %333 = vmatpush.msra.mxu0 %v112
    %334 = vmatpush.msra.mxu0 %v108
    %335 = vmatpush.msra.mxu0 %v104
    %336 = vmatmul.f32.gmra.mxu0 %v100
    %v337 = vpop.f32.mrf.mxu0
    %v338 = vadd.f32 %v234, %v337
    %339 = vdwg.mxu0
    %340 = vmatpush.msra.mxu0 %v228
    %341 = vmatpush.msra.mxu0 %v224
    %342 = vmatpush.msra.mxu0 %v220
    %343 = vmatpush.msra.mxu0 %v216
    %344 = vmatpush.msra.mxu0 %v212
    %345 = vmatpush.msra.mxu0 %v208
    %346 = vmatpush.msra.mxu0 %v204
    %347 = vmatpush.msra.mxu0 %v200
    %348 = vmatpush.msra.mxu0 %v196
    %349 = vmatpush.msra.mxu0 %v192
    %350 = vmatpush.msra.mxu0 %v188
    %351 = vmatpush.msra.mxu0 %v184
    %352 = vmatpush.msra.mxu0 %v180
    %353 = vmatpush.msra.mxu0 %v176
    %354 = vmatpush.msra.mxu0 %v172
    %355 = vmatpush.msra.mxu0 %v168
    %356 = vmatmul.f32.gmra.mxu0 %v101
    %v357 = vpop.f32.mrf.mxu0
    %v358 = vadd.f32 %v338, %v357
    %359 = vdwg.mxu0
    %360 = vmatpush.msra.mxu0 %v165
    %361 = vmatpush.msra.mxu0 %v161
    %362 = vmatpush.msra.mxu0 %v157
    %363 = vmatpush.msra.mxu0 %v153
    %364 = vmatpush.msra.mxu0 %v149
    %365 = vmatpush.msra.mxu0 %v145
    %366 = vmatpush.msra.mxu0 %v141
    %367 = vmatpush.msra.mxu0 %v137
    %368 = vmatpush.msra.mxu0 %v133
    %369 = vmatpush.msra.mxu0 %v129
    %370 = vmatpush.msra.mxu0 %v125
    %371 = vmatpush.msra.mxu0 %v121
    %372 = vmatpush.msra.mxu0 %v117
    %373 = vmatpush.msra.mxu0 %v113
    %374 = vmatpush.msra.mxu0 %v109
    %375 = vmatpush.msra.mxu0 %v105
    %376 = vmatmul.f32.gmra.mxu0 %v100
    %v377 = vpop.f32.mrf.mxu0
    %v378 = vadd.f32 %v235, %v377
    %379 = vdwg.mxu0
    %380 = vmatpush.msra.mxu0 %v229
    %381 = vmatpush.msra.mxu0 %v225
    %382 = vmatpush.msra.mxu0 %v221
    %383 = vmatpush.msra.mxu0 %v217
    %384 = vmatpush.msra.mxu0 %v213
    %385 = vmatpush.msra.mxu0 %v209
    %386 = vmatpush.msra.mxu0 %v205
    %387 = vmatpush.msra.mxu0 %v201
    %388 = vmatpush.msra.mxu0 %v197
    %389 = vmatpush.msra.mxu0 %v193
    %390 = vmatpush.msra.mxu0 %v189
    %391 = vmatpush.msra.mxu0 %v185
    %392 = vmatpush.msra.mxu0 %v181
    %393 = vmatpush.msra.mxu0 %v177
    %394 = vmatpush.msra.mxu0 %v173
    %395 = vmatpush.msra.mxu0 %v169
    %396 = vmatmul.f32.gmra.mxu0 %v101
    %v397 = vpop.f32.mrf.mxu0
    %v398 = vadd.f32 %v378, %v397
    %399 = vdwg.mxu0
    %v400 = vmax.f32 %v278, 0.0
    %v401 = vmax.f32 %v318, 0.0
    %v402 = vmax.f32 %v358, 0.0
    %v403 = vmax.f32 %v398, 0.0
    %v404 = vld [vmem:[#allocation4] sm:$0xff]
    %v405 = vld [vmem:[#allocation4 + $0x8] sm:$0xff]
    %v406 = vld [vmem:[#allocation4 + $0x10] sm:$0xff]
    %v407 = vld [vmem:[#allocation4 + $0x18] sm:$0xff]
    %v408 = vld [vmem:[#allocation4 + $0x20] sm:$0xff]
    %v409 = vld [vmem:[#allocation4 + $0x28] sm:$0xff]
    %v410 = vld [vmem:[#allocation4 + $0x30] sm:$0xff]
    %v411 = vld [vmem:[#allocation4 + $0x38] sm:$0xff]
    %v412 = vld [vmem:[#allocation4 + $0x40] sm:$0xff]
    %v413 = vld [vmem:[#allocation4 + $0x48] sm:$0xff]
    %v414 = vld [vmem:[#allocation4 + $0x50] sm:$0xff]
    %v415 = vld [vmem:[#allocation4 + $0x58] sm:$0xff]
    %v416 = vld [vmem:[#allocation4 + $0x60] sm:$0xff]
    %v417 = vld [vmem:[#allocation4 + $0x68] sm:$0xff]
    %v418 = vld [vmem:[#allocation4 + $0x70] sm:$0xff]
    %v419 = vld [vmem:[#allocation4 + $0x78] sm:$0xff]
    %v420 = vld [vmem:[#allocation4 + $0x80] sm:$0xff]
    %v421 = vld [vmem:[#allocation4 + $0x88] sm:$0xff]
    %v422 = vld [vmem:[#allocation4 + $0x90] sm:$0xff]
    %v423 = vld [vmem:[#allocation4 + $0x98] sm:$0xff]
    %v424 = vld [vmem:[#allocation4 + $0xa0] sm:$0xff]
    %v425 = vld [vmem:[#allocation4 + $0xa8] sm:$0xff]
    %v426 = vld [vmem:[#allocation4 + $0xb0] sm:$0xff]
    %v427 = vld [vmem:[#allocation4 + $0xb8] sm:$0xff]
    %v428 = vld [vmem:[#allocation4 + $0xc0] sm:$0xff]
    %v429 = vld [vmem:[#allocation4 + $0xc8] sm:$0xff]
    %v430 = vld [vmem:[#allocation4 + $0xd0] sm:$0xff]
    %v431 = vld [vmem:[#allocation4 + $0xd8] sm:$0xff]
    %v432 = vld [vmem:[#allocation4 + $0xe0] sm:$0xff]
    %v433 = vld [vmem:[#allocation4 + $0xe8] sm:$0xff]
    %v434 = vld [vmem:[#allocation4 + $0xf0] sm:$0xff]
    %v435 = vld [vmem:[#allocation4 + $0xf8] sm:$0xff]
    %v436 = vld [vmem:[#allocation4 + $0x100] sm:$0xff]
    %v437 = vld [vmem:[#allocation4 + $0x108] sm:$0xff]
    %v438 = vld [vmem:[#allocation4 + $0x110] sm:$0xff]
    %v439 = vld [vmem:[#allocation4 + $0x118] sm:$0xff]
    %v440 = vld [vmem:[#allocation4 + $0x120] sm:$0xff]
    %v441 = vld [vmem:[#allocation4 + $0x128] sm:$0xff]
    %v442 = vld [vmem:[#allocation4 + $0x130] sm:$0xff]
    %v443 = vld [vmem:[#allocation4 + $0x138] sm:$0xff]
    %v444 = vld [vmem:[#allocation4 + $0x140] sm:$0xff]
    %v445 = vld [vmem:[#allocation4 + $0x148] sm:$0xff]
    %v446 = vld [vmem:[#allocation4 + $0x150] sm:$0xff]
    %v447 = vld [vmem:[#allocation4 + $0x158] sm:$0xff]
    %v448 = vld [vmem:[#allocation4 + $0x160] sm:$0xff]
    %v449 = vld [vmem:[#allocation4 + $0x168] sm:$0xff]
    %v450 = vld [vmem:[#allocation4 + $0x170] sm:$0xff]
    %v451 = vld [vmem:[#allocation4 + $0x178] sm:$0xff]
    %v452 = vld [vmem:[#allocation4 + $0x180] sm:$0xff]
    %v453 = vld [vmem:[#allocation4 + $0x188] sm:$0xff]
    %v454 = vld [vmem:[#allocation4 + $0x190] sm:$0xff]
    %v455 = vld [vmem:[#allocation4 + $0x198] sm:$0xff]
    %v456 = vld [vmem:[#allocation4 + $0x1a0] sm:$0xff]
    %v457 = vld [vmem:[#allocation4 + $0x1a8] sm:$0xff]
    %v458 = vld [vmem:[#allocation4 + $0x1b0] sm:$0xff]
    %v459 = vld [vmem:[#allocation4 + $0x1b8] sm:$0xff]
    %v460 = vld [vmem:[#allocation4 + $0x1c0] sm:$0xff]
    %v461 = vld [vmem:[#allocation4 + $0x1c8] sm:$0xff]
    %v462 = vld [vmem:[#allocation4 + $0x1d0] sm:$0xff]
    %v463 = vld [vmem:[#allocation4 + $0x1d8] sm:$0xff]
    %v464 = vld [vmem:[#allocation4 + $0x1e0] sm:$0xff]
    %v465 = vld [vmem:[#allocation4 + $0x1e8] sm:$0xff]
    %v466 = vld [vmem:[#allocation4 + $0x1f0] sm:$0xff]
    %v467 = vld [vmem:[#allocation4 + $0x1f8] sm:$0xff]
    %v468 = vld [vmem:[#allocation4 + $0x200] sm:$0xff]
    %v469 = vld [vmem:[#allocation4 + $0x208] sm:$0xff]
    %v470 = vld [vmem:[#allocation4 + $0x210] sm:$0xff]
    %v471 = vld [vmem:[#allocation4 + $0x218] sm:$0xff]
    %v472 = vld [vmem:[#allocation4 + $0x220] sm:$0xff]
    %v473 = vld [vmem:[#allocation4 + $0x228] sm:$0xff]
    %v474 = vld [vmem:[#allocation4 + $0x230] sm:$0xff]
    %v475 = vld [vmem:[#allocation4 + $0x238] sm:$0xff]
    %v476 = vld [vmem:[#allocation4 + $0x240] sm:$0xff]
    %v477 = vld [vmem:[#allocation4 + $0x248] sm:$0xff]
    %v478 = vld [vmem:[#allocation4 + $0x250] sm:$0xff]
    %v479 = vld [vmem:[#allocation4 + $0x258] sm:$0xff]
    %v480 = vld [vmem:[#allocation4 + $0x260] sm:$0xff]
    %v481 = vld [vmem:[#allocation4 + $0x268] sm:$0xff]
    %v482 = vld [vmem:[#allocation4 + $0x270] sm:$0xff]
    %v483 = vld [vmem:[#allocation4 + $0x278] sm:$0xff]
    %v484 = vld [vmem:[#allocation4 + $0x280] sm:$0xff]
    %v485 = vld [vmem:[#allocation4 + $0x288] sm:$0xff]
    %v486 = vld [vmem:[#allocation4 + $0x290] sm:$0xff]
    %v487 = vld [vmem:[#allocation4 + $0x298] sm:$0xff]
    %v488 = vld [vmem:[#allocation4 + $0x2a0] sm:$0xff]
    %v489 = vld [vmem:[#allocation4 + $0x2a8] sm:$0xff]
    %v490 = vld [vmem:[#allocation4 + $0x2b0] sm:$0xff]
    %v491 = vld [vmem:[#allocation4 + $0x2b8] sm:$0xff]
    %v492 = vld [vmem:[#allocation4 + $0x2c0] sm:$0xff]
    %v493 = vld [vmem:[#allocation4 + $0x2c8] sm:$0xff]
    %v494 = vld [vmem:[#allocation4 + $0x2d0] sm:$0xff]
    %v495 = vld [vmem:[#allocation4 + $0x2d8] sm:$0xff]
    %v496 = vld [vmem:[#allocation4 + $0x2e0] sm:$0xff]
    %v497 = vld [vmem:[#allocation4 + $0x2e8] sm:$0xff]
    %v498 = vld [vmem:[#allocation4 + $0x2f0] sm:$0xff]
    %v499 = vld [vmem:[#allocation4 + $0x2f8] sm:$0xff]
    %v500 = vld [vmem:[#allocation4 + $0x300] sm:$0xff]
    %v501 = vld [vmem:[#allocation4 + $0x308] sm:$0xff]
    %v502 = vld [vmem:[#allocation4 + $0x310] sm:$0xff]
    %v503 = vld [vmem:[#allocation4 + $0x318] sm:$0xff]
    %v504 = vld [vmem:[#allocation4 + $0x320] sm:$0xff]
    %v505 = vld [vmem:[#allocation4 + $0x328] sm:$0xff]
    %v506 = vld [vmem:[#allocation4 + $0x330] sm:$0xff]
    %v507 = vld [vmem:[#allocation4 + $0x338] sm:$0xff]
    %v508 = vld [vmem:[#allocation4 + $0x340] sm:$0xff]
    %v509 = vld [vmem:[#allocation4 + $0x348] sm:$0xff]
    %v510 = vld [vmem:[#allocation4 + $0x350] sm:$0xff]
    %v511 = vld [vmem:[#allocation4 + $0x358] sm:$0xff]
    %v512 = vld [vmem:[#allocation4 + $0x360] sm:$0xff]
    %v513 = vld [vmem:[#allocation4 + $0x368] sm:$0xff]
    %v514 = vld [vmem:[#allocation4 + $0x370] sm:$0xff]
    %v515 = vld [vmem:[#allocation4 + $0x378] sm:$0xff]
    %v516 = vld [vmem:[#allocation4 + $0x380] sm:$0xff]
    %v517 = vld [vmem:[#allocation4 + $0x388] sm:$0xff]
    %v518 = vld [vmem:[#allocation4 + $0x390] sm:$0xff]
    %v519 = vld [vmem:[#allocation4 + $0x398] sm:$0xff]
    %v520 = vld [vmem:[#allocation4 + $0x3a0] sm:$0xff]
    %v521 = vld [vmem:[#allocation4 + $0x3a8] sm:$0xff]
    %v522 = vld [vmem:[#allocation4 + $0x3b0] sm:$0xff]
    %v523 = vld [vmem:[#allocation4 + $0x3b8] sm:$0xff]
    %v524 = vld [vmem:[#allocation4 + $0x3c0] sm:$0xff]
    %v525 = vld [vmem:[#allocation4 + $0x3c8] sm:$0xff]
    %v526 = vld [vmem:[#allocation4 + $0x3d0] sm:$0xff]
    %v527 = vld [vmem:[#allocation4 + $0x3d8] sm:$0xff]
    %v528 = vld [vmem:[#allocation4 + $0x3e0] sm:$0xff]
    %v529 = vld [vmem:[#allocation4 + $0x3e8] sm:$0xff]
    %v530 = vld [vmem:[#allocation4 + $0x3f0] sm:$0xff]
    %v531 = vld [vmem:[#allocation4 + $0x3f8] sm:$0xff]
    %v532 = vld [vmem:[%s4] sm:$0x3]
    %v534 = vperm.slane %v532, 0
    %v535 = vperm.slane %v532, 1
    %538 = vmatpush.msra.mxu0 %v434
    %539 = vmatpush.msra.mxu0 %v432
    %540 = vmatpush.msra.mxu0 %v430
    %541 = vmatpush.msra.mxu0 %v428
    %542 = vmatpush.msra.mxu0 %v426
    %543 = vmatpush.msra.mxu0 %v424
    %544 = vmatpush.msra.mxu0 %v422
    %545 = vmatpush.msra.mxu0 %v420
    %546 = vmatpush.msra.mxu0 %v418
    %547 = vmatpush.msra.mxu0 %v416
    %548 = vmatpush.msra.mxu0 %v414
    %549 = vmatpush.msra.mxu0 %v412
    %550 = vmatpush.msra.mxu0 %v410
    %551 = vmatpush.msra.mxu0 %v408
    %552 = vmatpush.msra.mxu0 %v406
    %553 = vmatpush.msra.mxu0 %v404
    %554 = vmatmul.f32.gmra.mxu0 %v400
    %v555 = vpop.f32.mrf.mxu0
    %v556 = vadd.f32 %v534, %v555
    %557 = vdwg.mxu0
    %558 = vmatpush.msra.mxu0 %v466
    %559 = vmatpush.msra.mxu0 %v464
    %560 = vmatpush.msra.mxu0 %v462
    %561 = vmatpush.msra.mxu0 %v460
    %562 = vmatpush.msra.mxu0 %v458
    %563 = vmatpush.msra.mxu0 %v456
    %564 = vmatpush.msra.mxu0 %v454
    %565 = vmatpush.msra.mxu0 %v452
    %566 = vmatpush.msra.mxu0 %v450
    %567 = vmatpush.msra.mxu0 %v448
    %568 = vmatpush.msra.mxu0 %v446
    %569 = vmatpush.msra.mxu0 %v444
    %570 = vmatpush.msra.mxu0 %v442
    %571 = vmatpush.msra.mxu0 %v440
    %572 = vmatpush.msra.mxu0 %v438
    %573 = vmatpush.msra.mxu0 %v436
    %574 = vmatmul.f32.gmra.mxu0 %v401
    %v575 = vpop.f32.mrf.mxu0
    %v576 = vadd.f32 %v556, %v575
    %577 = vdwg.mxu0
    %578 = vmatpush.msra.mxu0 %v498
    %579 = vmatpush.msra.mxu0 %v496
    %580 = vmatpush.msra.mxu0 %v494
    %581 = vmatpush.msra.mxu0 %v492
    %582 = vmatpush.msra.mxu0 %v490
    %583 = vmatpush.msra.mxu0 %v488
    %584 = vmatpush.msra.mxu0 %v486
    %585 = vmatpush.msra.mxu0 %v484
    %586 = vmatpush.msra.mxu0 %v482
    %587 = vmatpush.msra.mxu0 %v480
    %588 = vmatpush.msra.mxu0 %v478
    %589 = vmatpush.msra.mxu0 %v476
    %590 = vmatpush.msra.mxu0 %v474
    %591 = vmatpush.msra.mxu0 %v472
    %592 = vmatpush.msra.mxu0 %v470
    %593 = vmatpush.msra.mxu0 %v468
    %594 = vmatmul.f32.gmra.mxu0 %v402
    %v595 = vpop.f32.mrf.mxu0
    %v596 = vadd.f32 %v576, %v595
    %597 = vdwg.mxu0
    %598 = vmatpush.msra.mxu0 %v530
    %599 = vmatpush.msra.mxu0 %v528
    %600 = vmatpush.msra.mxu0 %v526
    %601 = vmatpush.msra.mxu0 %v524
    %602 = vmatpush.msra.mxu0 %v522
    %603 = vmatpush.msra.mxu0 %v520
    %604 = vmatpush.msra.mxu0 %v518
    %605 = vmatpush.msra.mxu0 %v516
    %606 = vmatpush.msra.mxu0 %v514
    %607 = vmatpush.msra.mxu0 %v512
    %608 = vmatpush.msra.mxu0 %v510
    %609 = vmatpush.msra.mxu0 %v508
    %610 = vmatpush.msra.mxu0 %v506
    %611 = vmatpush.msra.mxu0 %v504
    %612 = vmatpush.msra.mxu0 %v502
    %613 = vmatpush.msra.mxu0 %v500
    %614 = vmatmul.f32.gmra.mxu0 %v403
    %v615 = vpop.f32.mrf.mxu0
    %v616 = vadd.f32 %v596, %v615
    %617 = vdwg.mxu0
    %618 = vmatpush.msra.mxu0 %v435
    %619 = vmatpush.msra.mxu0 %v433
    %620 = vmatpush.msra.mxu0 %v431
    %621 = vmatpush.msra.mxu0 %v429
    %622 = vmatpush.msra.mxu0 %v427
    %623 = vmatpush.msra.mxu0 %v425
    %624 = vmatpush.msra.mxu0 %v423
    %625 = vmatpush.msra.mxu0 %v421
    %626 = vmatpush.msra.mxu0 %v419
    %627 = vmatpush.msra.mxu0 %v417
    %628 = vmatpush.msra.mxu0 %v415
    %629 = vmatpush.msra.mxu0 %v413
    %630 = vmatpush.msra.mxu0 %v411
    %631 = vmatpush.msra.mxu0 %v409
    %632 = vmatpush.msra.mxu0 %v407
    %633 = vmatpush.msra.mxu0 %v405
    %634 = vmatmul.f32.gmra.mxu0 %v400
    %v635 = vpop.f32.mrf.mxu0
    %v636 = vadd.f32 %v535, %v635
    %637 = vdwg.mxu0
    %638 = vmatpush.msra.mxu0 %v467
    %639 = vmatpush.msra.mxu0 %v465
    %640 = vmatpush.msra.mxu0 %v463
    %641 = vmatpush.msra.mxu0 %v461
    %642 = vmatpush.msra.mxu0 %v459
    %643 = vmatpush.msra.mxu0 %v457
    %644 = vmatpush.msra.mxu0 %v455
    %645 = vmatpush.msra.mxu0 %v453
    %646 = vmatpush.msra.mxu0 %v451
    %647 = vmatpush.msra.mxu0 %v449
    %648 = vmatpush.msra.mxu0 %v447
    %649 = vmatpush.msra.mxu0 %v445
    %650 = vmatpush.msra.mxu0 %v443
    %651 = vmatpush.msra.mxu0 %v441
    %652 = vmatpush.msra.mxu0 %v439
    %653 = vmatpush.msra.mxu0 %v437
    %654 = vmatmul.f32.gmra.mxu0 %v401
    %v655 = vpop.f32.mrf.mxu0
    %v656 = vadd.f32 %v636, %v655
    %657 = vdwg.mxu0
    %658 = vmatpush.msra.mxu0 %v499
    %659 = vmatpush.msra.mxu0 %v497
    %660 = vmatpush.msra.mxu0 %v495
    %661 = vmatpush.msra.mxu0 %v493
    %662 = vmatpush.msra.mxu0 %v491
    %663 = vmatpush.msra.mxu0 %v489
    %664 = vmatpush.msra.mxu0 %v487
    %665 = vmatpush.msra.mxu0 %v485
    %666 = vmatpush.msra.mxu0 %v483
    %667 = vmatpush.msra.mxu0 %v481
    %668 = vmatpush.msra.mxu0 %v479
    %669 = vmatpush.msra.mxu0 %v477
    %670 = vmatpush.msra.mxu0 %v475
    %671 = vmatpush.msra.mxu0 %v473
    %672 = vmatpush.msra.mxu0 %v471
    %673 = vmatpush.msra.mxu0 %v469
    %674 = vmatmul.f32.gmra.mxu0 %v402
    %v675 = vpop.f32.mrf.mxu0
    %v676 = vadd.f32 %v656, %v675
    %677 = vdwg.mxu0
    %678 = vmatpush.msra.mxu0 %v531
    %679 = vmatpush.msra.mxu0 %v529
    %680 = vmatpush.msra.mxu0 %v527
    %681 = vmatpush.msra.mxu0 %v525
    %682 = vmatpush.msra.mxu0 %v523
    %683 = vmatpush.msra.mxu0 %v521
    %684 = vmatpush.msra.mxu0 %v519
    %685 = vmatpush.msra.mxu0 %v517
    %686 = vmatpush.msra.mxu0 %v515
    %687 = vmatpush.msra.mxu0 %v513
    %688 = vmatpush.msra.mxu0 %v511
    %689 = vmatpush.msra.mxu0 %v509
    %690 = vmatpush.msra.mxu0 %v507
    %691 = vmatpush.msra.mxu0 %v505
    %692 = vmatpush.msra.mxu0 %v503
    %693 = vmatpush.msra.mxu0 %v501
    %694 = vmatmul.f32.gmra.mxu0 %v403
    %v695 = vpop.f32.mrf.mxu0
    %v696 = vadd.f32 %v676, %v695
    %697 = vdwg.mxu0
    %698 = vst [vmem:[%s11] sm:$0xff] %v616
    %699 = vst [vmem:[%s11 + $0x8] sm:$0xff] %v696
    %v700 = vld [vmem:[%s5] sm:$0xff]
    %v701 = vmul.f32 %v696, 0.5
    %v702 = vmul.f32 %v701, 1.442695
    %v703 = vpow.pop %v702
    %v704 = vmul.f32 %v700, %v703
    %v705 = vadd.f32 %v616, %v704
    %v706 = vld [vmem:[#allocation6] sm:$0xff]
    %v707 = vld [vmem:[#allocation6 + $0x8] sm:$0xff]
    %v708 = vld [vmem:[#allocation6 + $0x10] sm:$0xff]
    %v709 = vld [vmem:[#allocation6 + $0x18] sm:$0xff]
    %v710 = vld [vmem:[#allocation6 + $0x20] sm:$0xff]
    %v711 = vld [vmem:[#allocation6 + $0x28] sm:$0xff]
    %v712 = vld [vmem:[#allocation6 + $0x30] sm:$0xff]
    %v713 = vld [vmem:[#allocation6 + $0x38] sm:$0xff]
    %v714 = vld [vmem:[#allocation6 + $0x40] sm:$0xff]
    %v715 = vld [vmem:[#allocation6 + $0x48] sm:$0xff]
    %v716 = vld [vmem:[#allocation6 + $0x50] sm:$0xff]
    %v717 = vld [vmem:[#allocation6 + $0x58] sm:$0xff]
    %v718 = vld [vmem:[#allocation6 + $0x60] sm:$0xff]
    %v719 = vld [vmem:[#allocation6 + $0x68] sm:$0xff]
    %v720 = vld [vmem:[#allocation6 + $0x70] sm:$0xff]
    %v721 = vld [vmem:[#allocation6 + $0x78] sm:$0xff]
    %v722 = vld [vmem:[#allocation6 + $0x80] sm:$0xff]
    %v723 = vld [vmem:[#allocation6 + $0x88] sm:$0xff]
    %v724 = vld [vmem:[#allocation6 + $0x90] sm:$0xff]
    %v725 = vld [vmem:[#allocation6 + $0x98] sm:$0xff]
    %v726 = vld [vmem:[#allocation6 + $0xa0] sm:$0xff]
    %v727 = vld [vmem:[#allocation6 + $0xa8] sm:$0xff]
    %v728 = vld [vmem:[#allocation6 + $0xb0] sm:$0xff]
    %v729 = vld [vmem:[#allocation6 + $0xb8] sm:$0xff]
    %v730 = vld [vmem:[#allocation6 + $0xc0] sm:$0xff]
    %v731 = vld [vmem:[#allocation6 + $0xc8] sm:$0xff]
    %v732 = vld [vmem:[#allocation6 + $0xd0] sm:$0xff]
    %v733 = vld [vmem:[#allocation6 + $0xd8] sm:$0xff]
    %v734 = vld [vmem:[#allocation6 + $0xe0] sm:$0xff]
    %v735 = vld [vmem:[#allocation6 + $0xe8] sm:$0xff]
    %v736 = vld [vmem:[#allocation6 + $0xf0] sm:$0xff]
    %v737 = vld [vmem:[#allocation6 + $0xf8] sm:$0xff]
    %v738 = vld [vmem:[#allocation6 + $0x100] sm:$0xff]
    %v739 = vld [vmem:[#allocation6 + $0x108] sm:$0xff]
    %v740 = vld [vmem:[#allocation6 + $0x110] sm:$0xff]
    %v741 = vld [vmem:[#allocation6 + $0x118] sm:$0xff]
    %v742 = vld [vmem:[#allocation6 + $0x120] sm:$0xff]
    %v743 = vld [vmem:[#allocation6 + $0x128] sm:$0xff]
    %v744 = vld [vmem:[#allocation6 + $0x130] sm:$0xff]
    %v745 = vld [vmem:[#allocation6 + $0x138] sm:$0xff]
    %v746 = vld [vmem:[#allocation6 + $0x140] sm:$0xff]
    %v747 = vld [vmem:[#allocation6 + $0x148] sm:$0xff]
    %v748 = vld [vmem:[#allocation6 + $0x150] sm:$0xff]
    %v749 = vld [vmem:[#allocation6 + $0x158] sm:$0xff]
    %v750 = vld [vmem:[#allocation6 + $0x160] sm:$0xff]
    %v751 = vld [vmem:[#allocation6 + $0x168] sm:$0xff]
    %v752 = vld [vmem:[#allocation6 + $0x170] sm:$0xff]
    %v753 = vld [vmem:[#allocation6 + $0x178] sm:$0xff]
    %v754 = vld [vmem:[#allocation6 + $0x180] sm:$0xff]
    %v755 = vld [vmem:[#allocation6 + $0x188] sm:$0xff]
    %v756 = vld [vmem:[#allocation6 + $0x190] sm:$0xff]
    %v757 = vld [vmem:[#allocation6 + $0x198] sm:$0xff]
    %v758 = vld [vmem:[#allocation6 + $0x1a0] sm:$0xff]
    %v759 = vld [vmem:[#allocation6 + $0x1a8] sm:$0xff]
    %v760 = vld [vmem:[#allocation6 + $0x1b0] sm:$0xff]
    %v761 = vld [vmem:[#allocation6 + $0x1b8] sm:$0xff]
    %v762 = vld [vmem:[#allocation6 + $0x1c0] sm:$0xff]
    %v763 = vld [vmem:[#allocation6 + $0x1c8] sm:$0xff]
    %v764 = vld [vmem:[#allocation6 + $0x1d0] sm:$0xff]
    %v765 = vld [vmem:[#allocation6 + $0x1d8] sm:$0xff]
    %v766 = vld [vmem:[#allocation6 + $0x1e0] sm:$0xff]
    %v767 = vld [vmem:[#allocation6 + $0x1e8] sm:$0xff]
    %v768 = vld [vmem:[#allocation6 + $0x1f0] sm:$0xff]
    %v769 = vld [vmem:[#allocation6 + $0x1f8] sm:$0xff]
    %v770 = vld [vmem:[%s7] sm:$0xf]
    %v772 = vperm.slane %v770, 0
    %v773 = vperm.slane %v770, 1
    %v774 = vperm.slane %v770, 2
    %v775 = vperm.slane %v770, 3
    %780 = vmatpush.msra.mxu0 %v766
    %781 = vmatpush.msra.mxu0 %v762
    %782 = vmatpush.msra.mxu0 %v758
    %783 = vmatpush.msra.mxu0 %v754
    %784 = vmatpush.msra.mxu0 %v750
    %785 = vmatpush.msra.mxu0 %v746
    %786 = vmatpush.msra.mxu0 %v742
    %787 = vmatpush.msra.mxu0 %v738
    %788 = vmatpush.msra.mxu0 %v734
    %789 = vmatpush.msra.mxu0 %v730
    %790 = vmatpush.msra.mxu0 %v726
    %791 = vmatpush.msra.mxu0 %v722
    %792 = vmatpush.msra.mxu0 %v718
    %793 = vmatpush.msra.mxu0 %v714
    %794 = vmatpush.msra.mxu0 %v710
    %795 = vmatpush.msra.mxu0 %v706
    %796 = vmatmul.f32.gmra.mxu0 %v705
    %v797 = vpop.f32.mrf.mxu0
    %v798 = vadd.f32 %v772, %v797
    %799 = vdwg.mxu0
    %800 = vmatpush.msra.mxu0 %v767
    %801 = vmatpush.msra.mxu0 %v763
    %802 = vmatpush.msra.mxu0 %v759
    %803 = vmatpush.msra.mxu0 %v755
    %804 = vmatpush.msra.mxu0 %v751
    %805 = vmatpush.msra.mxu0 %v747
    %806 = vmatpush.msra.mxu0 %v743
    %807 = vmatpush.msra.mxu0 %v739
    %808 = vmatpush.msra.mxu0 %v735
    %809 = vmatpush.msra.mxu0 %v731
    %810 = vmatpush.msra.mxu0 %v727
    %811 = vmatpush.msra.mxu0 %v723
    %812 = vmatpush.msra.mxu0 %v719
    %813 = vmatpush.msra.mxu0 %v715
    %814 = vmatpush.msra.mxu0 %v711
    %815 = vmatpush.msra.mxu0 %v707
    %816 = vmatmul.f32.gmra.mxu0 %v705
    %v817 = vpop.f32.mrf.mxu0
    %v818 = vadd.f32 %v773, %v817
    %819 = vdwg.mxu0
    %820 = vmatpush.msra.mxu0 %v768
    %821 = vmatpush.msra.mxu0 %v764
    %822 = vmatpush.msra.mxu0 %v760
    %823 = vmatpush.msra.mxu0 %v756
    %824 = vmatpush.msra.mxu0 %v752
    %825 = vmatpush.msra.mxu0 %v748
    %826 = vmatpush.msra.mxu0 %v744
    %827 = vmatpush.msra.mxu0 %v740
    %828 = vmatpush.msra.mxu0 %v736
    %829 = vmatpush.msra.mxu0 %v732
    %830 = vmatpush.msra.mxu0 %v728
    %831 = vmatpush.msra.mxu0 %v724
    %832 = vmatpush.msra.mxu0 %v720
    %833 = vmatpush.msra.mxu0 %v716
    %834 = vmatpush.msra.mxu0 %v712
    %835 = vmatpush.msra.mxu0 %v708
    %836 = vmatmul.f32.gmra.mxu0 %v705
    %v837 = vpop.f32.mrf.mxu0
    %v838 = vadd.f32 %v774, %v837
    %839 = vdwg.mxu0
    %840 = vmatpush.msra.mxu0 %v769
    %841 = vmatpush.msra.mxu0 %v765
    %842 = vmatpush.msra.mxu0 %v761
    %843 = vmatpush.msra.mxu0 %v757
    %844 = vmatpush.msra.mxu0 %v753
    %845 = vmatpush.msra.mxu0 %v749
    %846 = vmatpush.msra.mxu0 %v745
    %847 = vmatpush.msra.mxu0 %v741
    %848 = vmatpush.msra.mxu0 %v737
    %849 = vmatpush.msra.mxu0 %v733
    %850 = vmatpush.msra.mxu0 %v729
    %851 = vmatpush.msra.mxu0 %v725
    %852 = vmatpush.msra.mxu0 %v721
    %853 = vmatpush.msra.mxu0 %v717
    %854 = vmatpush.msra.mxu0 %v713
    %855 = vmatpush.msra.mxu0 %v709
    %856 = vmatmul.f32.gmra.mxu0 %v705
    %v857 = vpop.f32.mrf.mxu0
    %v858 = vadd.f32 %v775, %v857
    %859 = vdwg.mxu0
    %v860 = vmax.f32 %v798, 0.0
    %v861 = vmax.f32 %v818, 0.0
    %v862 = vmax.f32 %v838, 0.0
    %v863 = vmax.f32 %v858, 0.0
    %v864 = vld [vmem:[#allocation7] sm:$0xff]
    %v865 = vld [vmem:[#allocation7 + $0x8] sm:$0xff]
    %v866 = vld [vmem:[#allocation7 + $0x10] sm:$0xff]
    %v867 = vld [vmem:[#allocation7 + $0x18] sm:$0xff]
    %v868 = vld [vmem:[#allocation7 + $0x20] sm:$0xff]
    %v869 = vld [vmem:[#allocation7 + $0x28] sm:$0xff]
    %v870 = vld [vmem:[#allocation7 + $0x30] sm:$0xff]
    %v871 = vld [vmem:[#allocation7 + $0x38] sm:$0xff]
    %v872 = vld [vmem:[#allocation7 + $0x40] sm:$0xff]
    %v873 = vld [vmem:[#allocation7 + $0x48] sm:$0xff]
    %v874 = vld [vmem:[#allocation7 + $0x50] sm:$0xff]
    %v875 = vld [vmem:[#allocation7 + $0x58] sm:$0xff]
    %v876 = vld [vmem:[#allocation7 + $0x60] sm:$0xff]
    %v877 = vld [vmem:[#allocation7 + $0x68] sm:$0xff]
    %v878 = vld [vmem:[#allocation7 + $0x70] sm:$0xff]
    %v879 = vld [vmem:[#allocation7 + $0x78] sm:$0xff]
    %v880 = vld [vmem:[#allocation7 + $0x80] sm:$0xff]
    %v881 = vld [vmem:[#allocation7 + $0x88] sm:$0xff]
    %v882 = vld [vmem:[#allocation7 + $0x90] sm:$0xff]
    %v883 = vld [vmem:[#allocation7 + $0x98] sm:$0xff]
    %v884 = vld [vmem:[#allocation7 + $0xa0] sm:$0xff]
    %v885 = vld [vmem:[#allocation7 + $0xa8] sm:$0xff]
    %v886 = vld [vmem:[#allocation7 + $0xb0] sm:$0xff]
    %v887 = vld [vmem:[#allocation7 + $0xb8] sm:$0xff]
    %v888 = vld [vmem:[#allocation7 + $0xc0] sm:$0xff]
    %v889 = vld [vmem:[#allocation7 + $0xc8] sm:$0xff]
    %v890 = vld [vmem:[#allocation7 + $0xd0] sm:$0xff]
    %v891 = vld [vmem:[#allocation7 + $0xd8] sm:$0xff]
    %v892 = vld [vmem:[#allocation7 + $0xe0] sm:$0xff]
    %v893 = vld [vmem:[#allocation7 + $0xe8] sm:$0xff]
    %v894 = vld [vmem:[#allocation7 + $0xf0] sm:$0xff]
    %v895 = vld [vmem:[#allocation7 + $0xf8] sm:$0xff]
    %v896 = vld [vmem:[#allocation7 + $0x100] sm:$0xff]
    %v897 = vld [vmem:[#allocation7 + $0x108] sm:$0xff]
    %v898 = vld [vmem:[#allocation7 + $0x110] sm:$0xff]
    %v899 = vld [vmem:[#allocation7 + $0x118] sm:$0xff]
    %v900 = vld [vmem:[#allocation7 + $0x120] sm:$0xff]
    %v901 = vld [vmem:[#allocation7 + $0x128] sm:$0xff]
    %v902 = vld [vmem:[#allocation7 + $0x130] sm:$0xff]
    %v903 = vld [vmem:[#allocation7 + $0x138] sm:$0xff]
    %v904 = vld [vmem:[#allocation7 + $0x140] sm:$0xff]
    %v905 = vld [vmem:[#allocation7 + $0x148] sm:$0xff]
    %v906 = vld [vmem:[#allocation7 + $0x150] sm:$0xff]
    %v907 = vld [vmem:[#allocation7 + $0x158] sm:$0xff]
    %v908 = vld [vmem:[#allocation7 + $0x160] sm:$0xff]
    %v909 = vld [vmem:[#allocation7 + $0x168] sm:$0xff]
    %v910 = vld [vmem:[#allocation7 + $0x170] sm:$0xff]
    %v911 = vld [vmem:[#allocation7 + $0x178] sm:$0xff]
    %v912 = vld [vmem:[#allocation7 + $0x180] sm:$0xff]
    %v913 = vld [vmem:[#allocation7 + $0x188] sm:$0xff]
    %v914 = vld [vmem:[#allocation7 + $0x190] sm:$0xff]
    %v915 = vld [vmem:[#allocation7 + $0x198] sm:$0xff]
    %v916 = vld [vmem:[#allocation7 + $0x1a0] sm:$0xff]
    %v917 = vld [vmem:[#allocation7 + $0x1a8] sm:$0xff]
    %v918 = vld [vmem:[#allocation7 + $0x1b0] sm:$0xff]
    %v919 = vld [vmem:[#allocation7 + $0x1b8] sm:$0xff]
    %v920 = vld [vmem:[#allocation7 + $0x1c0] sm:$0xff]
    %v921 = vld [vmem:[#allocation7 + $0x1c8] sm:$0xff]
    %v922 = vld [vmem:[#allocation7 + $0x1d0] sm:$0xff]
    %v923 = vld [vmem:[#allocation7 + $0x1d8] sm:$0xff]
    %v924 = vld [vmem:[#allocation7 + $0x1e0] sm:$0xff]
    %v925 = vld [vmem:[#allocation7 + $0x1e8] sm:$0xff]
    %v926 = vld [vmem:[#allocation7 + $0x1f0] sm:$0xff]
    %v927 = vld [vmem:[#allocation7 + $0x1f8] sm:$0xff]
    %v928 = vld [vmem:[#allocation7 + $0x200] sm:$0xff]
    %v929 = vld [vmem:[#allocation7 + $0x208] sm:$0xff]
    %v930 = vld [vmem:[#allocation7 + $0x210] sm:$0xff]
    %v931 = vld [vmem:[#allocation7 + $0x218] sm:$0xff]
    %v932 = vld [vmem:[#allocation7 + $0x220] sm:$0xff]
    %v933 = vld [vmem:[#allocation7 + $0x228] sm:$0xff]
    %v934 = vld [vmem:[#allocation7 + $0x230] sm:$0xff]
    %v935 = vld [vmem:[#allocation7 + $0x238] sm:$0xff]
    %v936 = vld [vmem:[#allocation7 + $0x240] sm:$0xff]
    %v937 = vld [vmem:[#allocation7 + $0x248] sm:$0xff]
    %v938 = vld [vmem:[#allocation7 + $0x250] sm:$0xff]
    %v939 = vld [vmem:[#allocation7 + $0x258] sm:$0xff]
    %v940 = vld [vmem:[#allocation7 + $0x260] sm:$0xff]
    %v941 = vld [vmem:[#allocation7 + $0x268] sm:$0xff]
    %v942 = vld [vmem:[#allocation7 + $0x270] sm:$0xff]
    %v943 = vld [vmem:[#allocation7 + $0x278] sm:$0xff]
    %v944 = vld [vmem:[#allocation7 + $0x280] sm:$0xff]
    %v945 = vld [vmem:[#allocation7 + $0x288] sm:$0xff]
    %v946 = vld [vmem:[#allocation7 + $0x290] sm:$0xff]
    %v947 = vld [vmem:[#allocation7 + $0x298] sm:$0xff]
    %v948 = vld [vmem:[#allocation7 + $0x2a0] sm:$0xff]
    %v949 = vld [vmem:[#allocation7 + $0x2a8] sm:$0xff]
    %v950 = vld [vmem:[#allocation7 + $0x2b0] sm:$0xff]
    %v951 = vld [vmem:[#allocation7 + $0x2b8] sm:$0xff]
    %v952 = vld [vmem:[#allocation7 + $0x2c0] sm:$0xff]
    %v953 = vld [vmem:[#allocation7 + $0x2c8] sm:$0xff]
    %v954 = vld [vmem:[#allocation7 + $0x2d0] sm:$0xff]
    %v955 = vld [vmem:[#allocation7 + $0x2d8] sm:$0xff]
    %v956 = vld [vmem:[#allocation7 + $0x2e0] sm:$0xff]
    %v957 = vld [vmem:[#allocation7 + $0x2e8] sm:$0xff]
    %v958 = vld [vmem:[#allocation7 + $0x2f0] sm:$0xff]
    %v959 = vld [vmem:[#allocation7 + $0x2f8] sm:$0xff]
    %v960 = vld [vmem:[#allocation7 + $0x300] sm:$0xff]
    %v961 = vld [vmem:[#allocation7 + $0x308] sm:$0xff]
    %v962 = vld [vmem:[#allocation7 + $0x310] sm:$0xff]
    %v963 = vld [vmem:[#allocation7 + $0x318] sm:$0xff]
    %v964 = vld [vmem:[#allocation7 + $0x320] sm:$0xff]
    %v965 = vld [vmem:[#allocation7 + $0x328] sm:$0xff]
    %v966 = vld [vmem:[#allocation7 + $0x330] sm:$0xff]
    %v967 = vld [vmem:[#allocation7 + $0x338] sm:$0xff]
    %v968 = vld [vmem:[#allocation7 + $0x340] sm:$0xff]
    %v969 = vld [vmem:[#allocation7 + $0x348] sm:$0xff]
    %v970 = vld [vmem:[#allocation7 + $0x350] sm:$0xff]
    %v971 = vld [vmem:[#allocation7 + $0x358] sm:$0xff]
    %v972 = vld [vmem:[#allocation7 + $0x360] sm:$0xff]
    %v973 = vld [vmem:[#allocation7 + $0x368] sm:$0xff]
    %v974 = vld [vmem:[#allocation7 + $0x370] sm:$0xff]
    %v975 = vld [vmem:[#allocation7 + $0x378] sm:$0xff]
    %v976 = vld [vmem:[#allocation7 + $0x380] sm:$0xff]
    %v977 = vld [vmem:[#allocation7 + $0x388] sm:$0xff]
    %v978 = vld [vmem:[#allocation7 + $0x390] sm:$0xff]
    %v979 = vld [vmem:[#allocation7 + $0x398] sm:$0xff]
    %v980 = vld [vmem:[#allocation7 + $0x3a0] sm:$0xff]
    %v981 = vld [vmem:[#allocation7 + $0x3a8] sm:$0xff]
    %v982 = vld [vmem:[#allocation7 + $0x3b0] sm:$0xff]
    %v983 = vld [vmem:[#allocation7 + $0x3b8] sm:$0xff]
    %v984 = vld [vmem:[#allocation7 + $0x3c0] sm:$0xff]
    %v985 = vld [vmem:[#allocation7 + $0x3c8] sm:$0xff]
    %v986 = vld [vmem:[#allocation7 + $0x3d0] sm:$0xff]
    %v987 = vld [vmem:[#allocation7 + $0x3d8] sm:$0xff]
    %v988 = vld [vmem:[#allocation7 + $0x3e0] sm:$0xff]
    %v989 = vld [vmem:[#allocation7 + $0x3e8] sm:$0xff]
    %v990 = vld [vmem:[#allocation7 + $0x3f0] sm:$0xff]
    %v991 = vld [vmem:[#allocation7 + $0x3f8] sm:$0xff]
    %v992 = vld [vmem:[%s9] sm:$0x3]
    %v994 = vperm.slane %v992, 0
    %v995 = vperm.slane %v992, 1
    %998 = vmatpush.msra.mxu0 %v894
    %999 = vmatpush.msra.mxu0 %v892
    %1000 = vmatpush.msra.mxu0 %v890
    %1001 = vmatpush.msra.mxu0 %v888
    %1002 = vmatpush.msra.mxu0 %v886
    %1003 = vmatpush.msra.mxu0 %v884
    %1004 = vmatpush.msra.mxu0 %v882
    %1005 = vmatpush.msra.mxu0 %v880
    %1006 = vmatpush.msra.mxu0 %v878
    %1007 = vmatpush.msra.mxu0 %v876
    %1008 = vmatpush.msra.mxu0 %v874
    %1009 = vmatpush.msra.mxu0 %v872
    %1010 = vmatpush.msra.mxu0 %v870
    %1011 = vmatpush.msra.mxu0 %v868
    %1012 = vmatpush.msra.mxu0 %v866
    %1013 = vmatpush.msra.mxu0 %v864
    %1014 = vmatmul.f32.gmra.mxu0 %v860
    %v1015 = vpop.f32.mrf.mxu0
    %v1016 = vadd.f32 %v994, %v1015
    %1017 = vdwg.mxu0
    %1018 = vmatpush.msra.mxu0 %v926
    %1019 = vmatpush.msra.mxu0 %v924
    %1020 = vmatpush.msra.mxu0 %v922
    %1021 = vmatpush.msra.mxu0 %v920
    %1022 = vmatpush.msra.mxu0 %v918
    %1023 = vmatpush.msra.mxu0 %v916
    %1024 = vmatpush.msra.mxu0 %v914
    %1025 = vmatpush.msra.mxu0 %v912
    %1026 = vmatpush.msra.mxu0 %v910
    %1027 = vmatpush.msra.mxu0 %v908
    %1028 = vmatpush.msra.mxu0 %v906
    %1029 = vmatpush.msra.mxu0 %v904
    %1030 = vmatpush.msra.mxu0 %v902
    %1031 = vmatpush.msra.mxu0 %v900
    %1032 = vmatpush.msra.mxu0 %v898
    %1033 = vmatpush.msra.mxu0 %v896
    %1034 = vmatmul.f32.gmra.mxu0 %v861
    %v1035 = vpop.f32.mrf.mxu0
    %v1036 = vadd.f32 %v1016, %v1035
    %1037 = vdwg.mxu0
    %1038 = vmatpush.msra.mxu0 %v958
    %1039 = vmatpush.msra.mxu0 %v956
    %1040 = vmatpush.msra.mxu0 %v954
    %1041 = vmatpush.msra.mxu0 %v952
    %1042 = vmatpush.msra.mxu0 %v950
    %1043 = vmatpush.msra.mxu0 %v948
    %1044 = vmatpush.msra.mxu0 %v946
    %1045 = vmatpush.msra.mxu0 %v944
    %1046 = vmatpush.msra.mxu0 %v942
    %1047 = vmatpush.msra.mxu0 %v940
    %1048 = vmatpush.msra.mxu0 %v938
    %1049 = vmatpush.msra.mxu0 %v936
    %1050 = vmatpush.msra.mxu0 %v934
    %1051 = vmatpush.msra.mxu0 %v932
    %1052 = vmatpush.msra.mxu0 %v930
    %1053 = vmatpush.msra.mxu0 %v928
    %1054 = vmatmul.f32.gmra.mxu0 %v862
    %v1055 = vpop.f32.mrf.mxu0
    %v1056 = vadd.f32 %v1036, %v1055
    %1057 = vdwg.mxu0
    %1058 = vmatpush.msra.mxu0 %v990
    %1059 = vmatpush.msra.mxu0 %v988
    %1060 = vmatpush.msra.mxu0 %v986
    %1061 = vmatpush.msra.mxu0 %v984
    %1062 = vmatpush.msra.mxu0 %v982
    %1063 = vmatpush.msra.mxu0 %v980
    %1064 = vmatpush.msra.mxu0 %v978
    %1065 = vmatpush.msra.mxu0 %v976
    %1066 = vmatpush.msra.mxu0 %v974
    %1067 = vmatpush.msra.mxu0 %v972
    %1068 = vmatpush.msra.mxu0 %v970
    %1069 = vmatpush.msra.mxu0 %v968
    %1070 = vmatpush.msra.mxu0 %v966
    %1071 = vmatpush.msra.mxu0 %v964
    %1072 = vmatpush.msra.mxu0 %v962
    %1073 = vmatpush.msra.mxu0 %v960
    %1074 = vmatmul.f32.gmra.mxu0 %v863
    %v1075 = vpop.f32.mrf.mxu0
    %v1076 = vadd.f32 %v1056, %v1075
    %1077 = vdwg.mxu0
    %1078 = vmatpush.msra.mxu0 %v895
    %1079 = vmatpush.msra.mxu0 %v893
    %1080 = vmatpush.msra.mxu0 %v891
    %1081 = vmatpush.msra.mxu0 %v889
    %1082 = vmatpush.msra.mxu0 %v887
    %1083 = vmatpush.msra.mxu0 %v885
    %1084 = vmatpush.msra.mxu0 %v883
    %1085 = vmatpush.msra.mxu0 %v881
    %1086 = vmatpush.msra.mxu0 %v879
    %1087 = vmatpush.msra.mxu0 %v877
    %1088 = vmatpush.msra.mxu0 %v875
    %1089 = vmatpush.msra.mxu0 %v873
    %1090 = vmatpush.msra.mxu0 %v871
    %1091 = vmatpush.msra.mxu0 %v869
    %1092 = vmatpush.msra.mxu0 %v867
    %1093 = vmatpush.msra.mxu0 %v865
    %1094 = vmatmul.f32.gmra.mxu0 %v860
    %v1095 = vpop.f32.mrf.mxu0
    %v1096 = vadd.f32 %v995, %v1095
    %1097 = vdwg.mxu0
    %1098 = vmatpush.msra.mxu0 %v927
    %1099 = vmatpush.msra.mxu0 %v925
    %1100 = vmatpush.msra.mxu0 %v923
    %1101 = vmatpush.msra.mxu0 %v921
    %1102 = vmatpush.msra.mxu0 %v919
    %1103 = vmatpush.msra.mxu0 %v917
    %1104 = vmatpush.msra.mxu0 %v915
    %1105 = vmatpush.msra.mxu0 %v913
    %1106 = vmatpush.msra.mxu0 %v911
    %1107 = vmatpush.msra.mxu0 %v909
    %1108 = vmatpush.msra.mxu0 %v907
    %1109 = vmatpush.msra.mxu0 %v905
    %1110 = vmatpush.msra.mxu0 %v903
    %1111 = vmatpush.msra.mxu0 %v901
    %1112 = vmatpush.msra.mxu0 %v899
    %1113 = vmatpush.msra.mxu0 %v897
    %1114 = vmatmul.f32.gmra.mxu0 %v861
    %v1115 = vpop.f32.mrf.mxu0
    %v1116 = vadd.f32 %v1096, %v1115
    %1117 = vdwg.mxu0
    %1118 = vmatpush.msra.mxu0 %v959
    %1119 = vmatpush.msra.mxu0 %v957
    %1120 = vmatpush.msra.mxu0 %v955
    %1121 = vmatpush.msra.mxu0 %v953
    %1122 = vmatpush.msra.mxu0 %v951
    %1123 = vmatpush.msra.mxu0 %v949
    %1124 = vmatpush.msra.mxu0 %v947
    %1125 = vmatpush.msra.mxu0 %v945
    %1126 = vmatpush.msra.mxu0 %v943
    %1127 = vmatpush.msra.mxu0 %v941
    %1128 = vmatpush.msra.mxu0 %v939
    %1129 = vmatpush.msra.mxu0 %v937
    %1130 = vmatpush.msra.mxu0 %v935
    %1131 = vmatpush.msra.mxu0 %v933
    %1132 = vmatpush.msra.mxu0 %v931
    %1133 = vmatpush.msra.mxu0 %v929
    %1134 = vmatmul.f32.gmra.mxu0 %v862
    %v1135 = vpop.f32.mrf.mxu0
    %v1136 = vadd.f32 %v1116, %v1135
    %1137 = vdwg.mxu0
    %1138 = vmatpush.msra.mxu0 %v991
    %1139 = vmatpush.msra.mxu0 %v989
    %1140 = vmatpush.msra.mxu0 %v987
    %1141 = vmatpush.msra.mxu0 %v985
    %1142 = vmatpush.msra.mxu0 %v983
    %1143 = vmatpush.msra.mxu0 %v981
    %1144 = vmatpush.msra.mxu0 %v979
    %1145 = vmatpush.msra.mxu0 %v977
    %1146 = vmatpush.msra.mxu0 %v975
    %1147 = vmatpush.msra.mxu0 %v973
    %1148 = vmatpush.msra.mxu0 %v971
    %1149 = vmatpush.msra.mxu0 %v969
    %1150 = vmatpush.msra.mxu0 %v967
    %1151 = vmatpush.msra.mxu0 %v965
    %1152 = vmatpush.msra.mxu0 %v963
    %1153 = vmatpush.msra.mxu0 %v961
    %1154 = vmatmul.f32.gmra.mxu0 %v863
    %v1155 = vpop.f32.mrf.mxu0
    %v1156 = vadd.f32 %v1136, %v1155
    %1157 = vdwg.mxu0
    %v1158 = vxor.u32 %v1076, 2147483648
    %v1159 = vxor.u32 %v1156, 2147483648
    %v1160 = vmul.f32 %v1158, 1.442695
    %v1161 = vpow.pop %v1160
    %v1162 = vmul.f32 %v1159, 1.442695
    %v1163 = vpow.pop %v1162
    %v1164 = vadd.f32 %v1161, 1.0
    %v1165 = vadd.f32 %v1163, 1.0
    %v1166 = vrcp.pop %v1164
    %v1167 = vmul.f32 %v1164, %v1166
    %v1168 = vsub.f32 1.0, %v1167
    %v1169 = vmul.f32 %v1166, %v1168
    %v1170 = vadd.f32 %v1166, %v1169
    %vm1171 = vweird.f32 %v1164
    %vm1172 = vweird.f32 %v1166
    %vm1173 = vmor %vm1171, %vm1172
    %v1174 = vsel %vm1173, %v1166, %v1170
    %v1175 = vand.u32 2147483647, %v1164
    %vm1176 = vcmp.eq.f32.partialorder %v1175, 8.507059e+37
    %v1177 = vand.u32 %v1164, 2147483648
    %v1178 = vor.u32 1.1754944e-38, %v1177
    %v1179 = vsel %vm1176, %v1178, %v1174
    %v1180 = vmul.f32 1.0, %v1179
    %v1181 = vrcp.pop %v1165
    %v1182 = vmul.f32 %v1165, %v1181
    %v1183 = vsub.f32 1.0, %v1182
    %v1184 = vmul.f32 %v1181, %v1183
    %v1185 = vadd.f32 %v1181, %v1184
    %vm1186 = vweird.f32 %v1165
    %vm1187 = vweird.f32 %v1181
    %vm1188 = vmor %vm1186, %vm1187
    %v1189 = vsel %vm1188, %v1181, %v1185
    %v1190 = vand.u32 2147483647, %v1165
    %vm1191 = vcmp.eq.f32.partialorder %v1190, 8.507059e+37
    %v1192 = vand.u32 %v1165, 2147483648
    %v1193 = vor.u32 1.1754944e-38, %v1192
    %v1194 = vsel %vm1191, %v1193, %v1189
    %v1195 = vmul.f32 1.0, %v1194
    %1196 = vst [vmem:[%s10] sm:$0xff] %v1180
    %1197 = vst [vmem:[%s10 + $0x8] sm:$0xff] %v1195
    // Predicated region
    $region58: #{vae_forward.1} parent=1 // pred_check
      _
    $region59: #{vae_forward.1} parent=1 // pred_check_branch
      %1199 = sbr.rel (0) target = $region61
    $region60: #{vae_forward.1} parent=1 // pred_region
      _
    $region61: #{vae_forward.1} parent=1 // pred_fallthru
      _
    // Predicated region
    $region62: #{vae_forward.1} parent=1 // pred_check
      _
    $region63: #{vae_forward.1} parent=1 // pred_check_branch
      %1201 = sbr.rel (0) target = $region65
    $region64: #{vae_forward.1} parent=1 // pred_region
      _
    $region65: #{vae_forward.1} parent=1 // pred_fallthru
      _
    // Predicated region
    $region66: #{vae_forward.1} parent=1 // pred_check
      _
    $region67: #{vae_forward.1} parent=1 // pred_check_branch
      %1203 = sbr.rel (0) target = $region69
    $region68: #{vae_forward.1} parent=1 // pred_region
      _
    $region69: #{vae_forward.1} parent=1 // pred_fallthru
      _
    // Predicated region
    $region70: #{vae_forward.1} parent=1 // pred_check
      _
    $region71: #{vae_forward.1} parent=1 // pred_check_branch
      %1205 = sbr.rel (0) target = $region73
    $region72: #{vae_forward.1} parent=1 // pred_region
      _
    $region73: #{vae_forward.1} parent=1 // pred_fallthru
      _
    %1206 = vsyncpa [#allocation3], 1
    %1207 = vsyncpa [#allocation5], 1
    %1208 = vsyncpa [#allocation8], 1

</llo_original>
